<compile_context>
chip_gen: v5e
topology: v5e:2x2
jax: 0.10.0
libtpu: 0.0.40
codegen_flags: <defaults>
</compile_context>

<pallas_src>
import functools

import jax
import jax.numpy as jnp
from jax.experimental import pallas as pl
from jax.experimental.pallas import tpu as pltpu


def _round_up(x, m):
    return -(-x // m) * m


def _pick_tb(b, tb_max, min_grid=2):
    """Largest multiple-of-8 batch tile <= tb_max that divides the 8-rounded
    batch (no padding waste) and leaves at least `min_grid` grid steps
    (preferably an even number, so both v7x TensorCores stay busy)."""
    b8 = _round_up(max(b, 1), 8)
    if b8 // 8 < min_grid:
        return b8
    best_any, best_even = 8, 0
    for t in range(8, max(8, min(tb_max, b8)) + 1, 8):
        if b8 % t:
            continue
        g = b8 // t
        if g < min_grid:
            continue
        best_any = t
        if g % 2 == 0:
            best_even = t
    if best_even > 0 and best_even >= best_any // 2:
        return best_even
    return best_any


def _vmem_bytes_per_batch(q_len, kv_len, dim_q, in_bytes):
    """Rough per-batch-element VMEM footprint: the lane dim of every on-chip
    tile pads to 128; counts double-buffered I/O blocks plus the dominant live
    f32 intermediates (projections, attention maps, c_q/qcat/aw/z)."""
    lane = 128
    qs = _round_up(q_len, 8)
    ks = _round_up(kv_len, 8)
    es = _round_up(dim_q, 8)
    blocks = 2 * (qs + ks) * lane * in_bytes + 2 * es * lane * 4
    inter = 4 * lane * (6 * qs + 2 * ks + 2 * es)
    return blocks + inter


def _coattention_kernel(q_ref, k_ref, wq_t_ref, bq_ref, wk_t_ref, bk_ref,
                        wl_t_ref, bl_ref, out_ref, *, tb, q_len, kv_len, dim_q):
    f32 = jnp.float32
    q3 = q_ref[...]                    # (tb, q_len, dim_q)   compute dtype
    k3 = k_ref[...]                    # (tb, kv_len, dim_kv) compute dtype
    cdt = q3.dtype                     # f32 or bf16 (MXU operand dtype)
    dim_kv = k3.shape[-1]
    wq_t = wq_t_ref[...]               # (dim_q, dim_q)   == Wq^T
    wk_t = wk_t_ref[...]               # (dim_kv, dim_q)  == Wk^T
    wl_t = wl_t_ref[...]               # (kv_len, dim_q)  == Wl^T (seq_len == kv_len)
    bq = bq_ref[...]                   # (1, dim_q)  f32
    bk = bk_ref[...]                   # (1, dim_q)  f32
    bl_col = bl_ref[...]               # (dim_q, 1)  f32

    # --- projections, flattened across the whole batch tile (fills MXU rows).
    # Reshapes are layout-free when q_len / kv_len are multiples of 8.
    qp2 = jnp.dot(q3.reshape(tb * q_len, dim_q), wq_t,
                  preferred_element_type=f32) + bq               # (tb*q_len, dim_q)
    kp2 = jnp.dot(k3.reshape(tb * kv_len, dim_kv), wk_t,
                  preferred_element_type=f32) + bk               # (tb*kv_len, dim_q)
    qp3 = qp2.astype(cdt).reshape(tb, q_len, dim_q)
    kp3 = kp2.astype(cdt).reshape(tb, kv_len, dim_q)

    # --- attention logits, batched over the tile: (tb, q_len, kv_len) ---
    qk = jnp.einsum('bqd,bkd->bqk', qp3, kp3, preferred_element_type=f32)

    # softmax over q_len (torch dim=1) -- kept in f32
    e0 = jnp.exp(qk - jnp.max(qk, axis=1, keepdims=True))
    a_q = e0 * pl.reciprocal(jnp.sum(e0, axis=1, keepdims=True), approx=True)
    # softmax over kv_len (torch dim=2)
    e1 = jnp.exp(qk - jnp.max(qk, axis=2, keepdims=True))
    a_k = e1 * pl.reciprocal(jnp.sum(e1, axis=2, keepdims=True), approx=True)

    # c_q = a_q @ k_proj : (tb, q_len, dim_q)
    c_q = jnp.einsum('bqk,bke->bqe', a_q.astype(cdt), kp3,
                     preferred_element_type=f32)

    # aw = a_k @ Wl^T (flattened across the tile), then ONE shared transpose so
    # the fused final contraction is a canonical (M,K)x(K,N) batched matmul.
    aw2 = jnp.dot(a_k.reshape(tb * q_len, kv_len).astype(cdt), wl_t,
                  preferred_element_type=f32)                    # (tb*q_len, dim_q)
    awt = jnp.swapaxes(aw2.astype(cdt).reshape(tb, q_len, dim_q), 1, 2)

    # Fused final stage: qcat = [q | c_q]; single batched matmul produces both
    # halves of attn^T at once; single full-block store.
    qcat = jnp.concatenate([q3, c_q.astype(cdt)], axis=-1)       # (tb, q_len, 2*dim_q)
    z = jnp.einsum('beq,bqj->bej', awt, qcat,
                   preferred_element_type=f32)                   # (tb, dim_q, 2*dim_q)
    out_ref[...] = (z + bl_col).astype(out_ref.dtype)


def coattention_pallas(q, k, wq, bq, wk, bk, wl, bl, *,
                       v=None, mask=None, tb_max=None, compute_dtype=None):
    """Pallas implementation of CoAttention.forward (v / mask unused, as in torch)."""
    del v, mask   # accepted but never used by the reference forward
    b, q_len, dim_q = q.shape
    _, kv_len, dim_kv = k.shape
    assert wl.shape == (dim_q, kv_len), "self.linear in_features (seq_len) must equal kv_len"

    f32 = jnp.float32
    cdt = jnp.dtype(compute_dtype) if compute_dtype is not None else jnp.dtype(q.dtype)

    # --- per-generation VMEM budget (v7x: 64 MiB physical, v5e/v6e: 128 MiB) ---
    try:
        vmem_cap = int(pltpu.get_tpu_info().vmem_capacity_bytes)
    except Exception:
        vmem_cap = 64 * 1024 * 1024          # conservative (v7x-sized) fallback
    vmem_budget = vmem_cap // 2              # headroom for double-buffering / temps
    vmem_limit = min(int(vmem_cap * 0.85), 100 * 1024 * 1024)

    # --- batch tile: VMEM-capped, divides the 8-rounded batch, grid >= 2 ---
    per_batch = _vmem_bytes_per_batch(q_len, kv_len, dim_q, cdt.itemsize)
    tb_cap = max(8, (vmem_budget // per_batch) // 8 * 8)
    if tb_max is None:
        tb_max = 512                         # amortizes the ~0.35us/step overhead
    tb = _pick_tb(b, max(8, min(tb_max, tb_cap)))

    b_pad = _round_up(b, 8)
    if b_pad != b:                           # <= 7 zero rows, sliced off at the end
        q = jnp.pad(q, ((0, b_pad - b), (0, 0), (0, 0)))
        k = jnp.pad(k, ((0, b_pad - b), (0, 0), (0, 0)))

    # Pre-transpose weights (nn.Linear stores (out, in)); cast MXU operands.
    q_in = q.astype(cdt)
    k_in = k.astype(cdt)
    wq_t = wq.T.astype(cdt)                  # (dim_q, dim_q)
    wk_t = wk.T.astype(cdt)                  # (dim_kv, dim_q)
    wl_t = wl.T.astype(cdt)                  # (kv_len, dim_q)
    bq2 = bq.reshape(1, dim_q).astype(f32)
    bk2 = bk.reshape(1, dim_q).astype(f32)
    bl_col = bl.reshape(dim_q, 1).astype(f32)

    kernel = functools.partial(_coattention_kernel, tb=tb, q_len=q_len,
                               kv_len=kv_len, dim_q=dim_q)

    grid_spec = pltpu.PrefetchScalarGridSpec(
        num_scalar_prefetch=0,
        grid=(b_pad // tb,),
        in_specs=[
            pl.BlockSpec((tb, q_len, dim_q), lambda i: (i, 0, 0)),
            pl.BlockSpec((tb, kv_len, dim_kv), lambda i: (i, 0, 0)),
            pl.BlockSpec((dim_q, dim_q), lambda i: (0, 0)),
            pl.BlockSpec((1, dim_q), lambda i: (0, 0)),
            pl.BlockSpec((dim_kv, dim_q), lambda i: (0, 0)),
            pl.BlockSpec((1, dim_q), lambda i: (0, 0)),
            pl.BlockSpec((kv_len, dim_q), lambda i: (0, 0)),
            pl.BlockSpec((dim_q, 1), lambda i: (0, 0)),
        ],
        out_specs=pl.BlockSpec((tb, dim_q, 2 * dim_q), lambda i: (i, 0, 0)),
    )

    flops = 2 * b_pad * (q_len * dim_q * dim_q            # q_proj
                         + kv_len * dim_kv * dim_q        # k_proj
                         + 3 * q_len * kv_len * dim_q     # qk, c_q, aw
                         + dim_q * q_len * 2 * dim_q)     # fused z
    transcendentals = 2 * b_pad * q_len * kv_len           # the two exps
    bytes_accessed = (q_in.size * q_in.dtype.itemsize
                      + k_in.size * k_in.dtype.itemsize
                      + b_pad * dim_q * 2 * dim_q * 4)
    cost = pl.CostEstimate(flops=int(flops),
                           transcendentals=int(transcendentals),
                           bytes_accessed=int(bytes_accessed))

    out_t = pl.pallas_call(
        kernel,
        out_shape=jax.ShapeDtypeStruct((b_pad, dim_q, 2 * dim_q), jnp.float32),
        grid_spec=grid_spec,
        compiler_params=pltpu.CompilerParams(
            dimension_semantics=("parallel",),
            vmem_limit_bytes=vmem_limit),
        cost_estimate=cost,
    )(q_in, k_in, wq_t, bq2, wk_t, bk2, wl_t, bl_col)

    # Kernel emits attn^T (b, dim_q, 2*dim_q); restore torch layout and unpad.
    return jnp.swapaxes(out_t, 1, 2)[:b]


def coattention_ref(q, k, wq, bq, wk, bk, wl, bl):
    """Pure-JAX reference mirroring the PyTorch forward exactly."""
    qp = jnp.einsum('bld,ed->ble', q, wq) + bq
    kp = jnp.einsum('bld,ed->ble', k, wk) + bk
    qk = jnp.einsum('bqe,bke->bqk', qp, kp)
    a_q = jax.nn.softmax(qk, axis=1)
    a_k = jax.nn.softmax(qk, axis=2)
    c_q = jnp.einsum('bqk,bke->bqe', a_q, kp)
    qcat = jnp.concatenate([q, c_q], axis=2)
    c_k = jnp.einsum('bqk,bqe->bke', a_k, qcat)          # (b, kv_len, 2*dim_q)
    c_k_t = jnp.swapaxes(c_k, 1, 2)                      # (b, 2*dim_q, kv_len)
    attn = jnp.einsum('bek,dk->bed', c_k_t, wl) + bl
    return attn


if __name__ == "__main__":
    # Small shapes consistent with the module (kv_len == seq_len for self.linear).
    B, Q_LEN, DIM_Q = 16, 8, 12
    KV_LEN, DIM_KV = 16, 32

    key = jax.random.PRNGKey(0)
    ks = jax.random.split(key, 9)

    q = jax.random.normal(ks[0], (B, Q_LEN, DIM_Q), jnp.float32)
    k = jax.random.normal(ks[1], (B, KV_LEN, DIM_KV), jnp.float32)
    v = jax.random.normal(ks[2], (B, KV_LEN, DIM_KV), jnp.float32)  # unused by forward

    # Deterministic parameter init (nn.Linear convention: weight (out, in)).
    def init_linear(kw, kb, out_f, in_f):
        s = 1.0 / jnp.sqrt(jnp.float32(in_f))
        w = jax.random.uniform(kw, (out_f, in_f), jnp.float32, -s, s)
        bvec = jax.random.uniform(kb, (out_f,), jnp.float32, -s, s)
        return w, bvec

    wq, bq = init_linear(ks[3], ks[4], DIM_Q, DIM_Q)      # q_proj
    wk, bk = init_linear(ks[5], ks[6], DIM_Q, DIM_KV)     # k_proj
    wl, bl = init_linear(ks[7], ks[8], DIM_Q, KV_LEN)     # linear(seq_len -> dim_q)

    ref = coattention_ref(q, k, wq, bq, wk, bk, wl, bl)

    # f32 path: strict numerical check against the reference.
    out = coattention_pallas(q, k, wq, bq, wk, bk, wl, bl, v=v)
    out = jax.block_until_ready(out)
    assert out.shape == (B, 2 * DIM_Q, DIM_Q), out.shape
    assert jnp.allclose(out, ref, atol=1e-2, rtol=1e-2), \
        float(jnp.max(jnp.abs(out - ref)))

    # bf16 MXU-input path (v6e/v7x feedback): exercised with a loose sanity check.
    out_bf = coattention_pallas(q, k, wq, bq, wk, bk, wl, bl, v=v,
                                compute_dtype=jnp.bfloat16)
    out_bf = jax.block_until_ready(out_bf)
    assert out_bf.shape == (B, 2 * DIM_Q, DIM_Q)
    assert bool(jnp.all(jnp.isfinite(out_bf)))
    assert float(jnp.max(jnp.abs(out_bf - ref))) < 0.5

    print("KERNEL_OK")
</pallas_src>

<mosaic_0001>
module attributes {stable_mosaic.version = 11 : i64} {
  func.func @_coattention_kernel(%arg0: i32, %arg1: memref<8x8x12xf32, #tpu.memory_space<vmem>>, %arg2: memref<8x16x32xf32, #tpu.memory_space<vmem>>, %arg3: memref<12x12xf32, #tpu.memory_space<vmem>>, %arg4: memref<1x12xf32, #tpu.memory_space<vmem>>, %arg5: memref<32x12xf32, #tpu.memory_space<vmem>>, %arg6: memref<1x12xf32, #tpu.memory_space<vmem>>, %arg7: memref<16x12xf32, #tpu.memory_space<vmem>>, %arg8: memref<12x1xf32, #tpu.memory_space<vmem>>, %arg9: memref<8x12x24xf32, #tpu.memory_space<vmem>>) attributes {dimension_semantics = [#tpu.dimension_semantics<parallel>], iteration_bounds = array<i64: 2>, scalar_prefetch = 0 : i64, scratch_operands = 0 : i64, tpu.core_type = #tpu.core_type<tc>, window_params = [{transform_indices = @transform_0, window_bounds = array<i64: 8, 8, 12>}, {transform_indices = @transform_1, window_bounds = array<i64: 8, 16, 32>}, {pipeline_mode = #tpu.pipeline_mode<synchronous>, transform_indices = @transform_2, window_bounds = array<i64: 12, 12>}, {pipeline_mode = #tpu.pipeline_mode<synchronous>, transform_indices = @transform_3, window_bounds = array<i64: 1, 12>}, {pipeline_mode = #tpu.pipeline_mode<synchronous>, transform_indices = @transform_4, window_bounds = array<i64: 32, 12>}, {pipeline_mode = #tpu.pipeline_mode<synchronous>, transform_indices = @transform_5, window_bounds = array<i64: 1, 12>}, {pipeline_mode = #tpu.pipeline_mode<synchronous>, transform_indices = @transform_6, window_bounds = array<i64: 16, 12>}, {pipeline_mode = #tpu.pipeline_mode<synchronous>, transform_indices = @transform_7, window_bounds = array<i64: 12, 1>}, {transform_indices = @transform_8, window_bounds = array<i64: 8, 12, 24>}]} {
    %c0 = arith.constant 0 : index
    %c0_0 = arith.constant 0 : index
    %c0_1 = arith.constant 0 : index
    %0 = vector.load %arg1[%c0, %c0_0, %c0_1] : memref<8x8x12xf32, #tpu.memory_space<vmem>>, vector<8x8x12xf32>
    %c0_2 = arith.constant 0 : index
    %c0_3 = arith.constant 0 : index
    %c0_4 = arith.constant 0 : index
    %1 = vector.load %arg2[%c0_2, %c0_3, %c0_4] : memref<8x16x32xf32, #tpu.memory_space<vmem>>, vector<8x16x32xf32>
    %c0_5 = arith.constant 0 : index
    %c0_6 = arith.constant 0 : index
    %2 = vector.load %arg3[%c0_5, %c0_6] : memref<12x12xf32, #tpu.memory_space<vmem>>, vector<12x12xf32>
    %c0_7 = arith.constant 0 : index
    %c0_8 = arith.constant 0 : index
    %3 = vector.load %arg5[%c0_7, %c0_8] : memref<32x12xf32, #tpu.memory_space<vmem>>, vector<32x12xf32>
    %c0_9 = arith.constant 0 : index
    %c0_10 = arith.constant 0 : index
    %4 = vector.load %arg7[%c0_9, %c0_10] : memref<16x12xf32, #tpu.memory_space<vmem>>, vector<16x12xf32>
    %c0_11 = arith.constant 0 : index
    %c0_12 = arith.constant 0 : index
    %5 = vector.load %arg4[%c0_11, %c0_12] : memref<1x12xf32, #tpu.memory_space<vmem>>, vector<1x12xf32>
    %c0_13 = arith.constant 0 : index
    %c0_14 = arith.constant 0 : index
    %6 = vector.load %arg6[%c0_13, %c0_14] : memref<1x12xf32, #tpu.memory_space<vmem>>, vector<1x12xf32>
    %c0_15 = arith.constant 0 : index
    %c0_16 = arith.constant 0 : index
    %7 = vector.load %arg8[%c0_15, %c0_16] : memref<12x1xf32, #tpu.memory_space<vmem>>, vector<12x1xf32>
    %8 = vector.shape_cast %0 : vector<8x8x12xf32> to vector<64x12xf32>
    %cst = arith.constant dense<0.000000e+00> : vector<64x12xf32>
    %9 = tpu.matmul %8, %2, %cst {dimension_numbers = #tpu.dot_dimension_numbers<[1], [0], [0], [1], [0, 0, 1, 1], [], []>} : vector<64x12xf32>, vector<12x12xf32>, vector<64x12xf32> -> vector<64x12xf32>
    %10 = vector.broadcast %5 : vector<1x12xf32> to vector<64x12xf32>
    %11 = arith.addf %9, %10 : vector<64x12xf32>
    %12 = vector.shape_cast %1 : vector<8x16x32xf32> to vector<128x32xf32>
    %cst_17 = arith.constant dense<0.000000e+00> : vector<128x12xf32>
    %13 = tpu.matmul %12, %3, %cst_17 {dimension_numbers = #tpu.dot_dimension_numbers<[1], [0], [0], [1], [0, 0, 1, 1], [], []>} : vector<128x32xf32>, vector<32x12xf32>, vector<128x12xf32> -> vector<128x12xf32>
    %14 = vector.broadcast %6 : vector<1x12xf32> to vector<128x12xf32>
    %15 = arith.addf %13, %14 : vector<128x12xf32>
    %16 = vector.shape_cast %11 : vector<64x12xf32> to vector<8x8x12xf32>
    %17 = vector.shape_cast %15 : vector<128x12xf32> to vector<8x16x12xf32>
    "tpu.trace_start"() <{level = 10 : i32, message = "bqd,bkd->bqk"}> : () -> ()
    %cst_18 = arith.constant dense<0.000000e+00> : vector<8x8x16xf32>
    %18 = tpu.matmul %16, %17, %cst_18 {dimension_numbers = #tpu.dot_dimension_numbers<[2], [2], [1], [1], [0, 0, 0, 1, 1, 1], [0], [0]>} : vector<8x8x12xf32>, vector<8x16x12xf32>, vector<8x8x16xf32> -> vector<8x8x16xf32>
    "tpu.trace_stop"() : () -> ()
    %cst_19 = arith.constant dense<0xFF800000> : vector<8x16xf32>
    %19 = vector.multi_reduction <maximumf>, %18, %cst_19 [1] : vector<8x8x16xf32> to vector<8x16xf32>
    %20 = vector.shape_cast %19 : vector<8x16xf32> to vector<8x1x16xf32>
    %21 = vector.broadcast %20 : vector<8x1x16xf32> to vector<8x8x16xf32>
    %22 = arith.subf %18, %21 : vector<8x8x16xf32>
    %23 = math.exp %22 : vector<8x8x16xf32>
    %cst_20 = arith.constant dense<0.000000e+00> : vector<8x16xf32>
    %24 = vector.multi_reduction <add>, %23, %cst_20 [1] : vector<8x8x16xf32> to vector<8x16xf32>
    %25 = vector.shape_cast %24 : vector<8x16xf32> to vector<8x1x16xf32>
    %26 = tpu.reciprocal %25 {approx = true} : vector<8x1x16xf32> -> vector<8x1x16xf32>
    %27 = vector.broadcast %26 : vector<8x1x16xf32> to vector<8x8x16xf32>
    %28 = arith.mulf %23, %27 : vector<8x8x16xf32>
    %cst_21 = arith.constant dense<0xFF800000> : vector<8x8xf32>
    %29 = vector.multi_reduction <maximumf>, %18, %cst_21 [2] : vector<8x8x16xf32> to vector<8x8xf32>
    %30 = vector.shape_cast %29 : vector<8x8xf32> to vector<8x8x1xf32>
    %31 = vector.broadcast %30 : vector<8x8x1xf32> to vector<8x8x16xf32>
    %32 = arith.subf %18, %31 : vector<8x8x16xf32>
    %33 = math.exp %32 : vector<8x8x16xf32>
    %cst_22 = arith.constant dense<0.000000e+00> : vector<8x8xf32>
    %34 = vector.multi_reduction <add>, %33, %cst_22 [2] : vector<8x8x16xf32> to vector<8x8xf32>
    %35 = vector.shape_cast %34 : vector<8x8xf32> to vector<8x8x1xf32>
    %36 = tpu.reciprocal %35 {approx = true} : vector<8x8x1xf32> -> vector<8x8x1xf32>
    %37 = vector.broadcast %36 : vector<8x8x1xf32> to vector<8x8x16xf32>
    %38 = arith.mulf %33, %37 : vector<8x8x16xf32>
    "tpu.trace_start"() <{level = 10 : i32, message = "bqk,bke->bqe"}> : () -> ()
    %cst_23 = arith.constant dense<0.000000e+00> : vector<8x8x12xf32>
    %39 = tpu.matmul %28, %17, %cst_23 {dimension_numbers = #tpu.dot_dimension_numbers<[2], [1], [1], [2], [0, 0, 0, 1, 1, 2], [0], [0]>} : vector<8x8x16xf32>, vector<8x16x12xf32>, vector<8x8x12xf32> -> vector<8x8x12xf32>
    "tpu.trace_stop"() : () -> ()
    %40 = vector.shape_cast %38 : vector<8x8x16xf32> to vector<64x16xf32>
    %cst_24 = arith.constant dense<0.000000e+00> : vector<64x12xf32>
    %41 = tpu.matmul %40, %4, %cst_24 {dimension_numbers = #tpu.dot_dimension_numbers<[1], [0], [0], [1], [0, 0, 1, 1], [], []>} : vector<64x16xf32>, vector<16x12xf32>, vector<64x12xf32> -> vector<64x12xf32>
    %42 = vector.shape_cast %41 : vector<64x12xf32> to vector<8x8x12xf32>
    %43 = tpu.transpose %42, [0, 2, 1] : vector<8x8x12xf32> -> vector<8x12x8xf32>
    %44 = tpu.concatenate %0, %39 in 2 : vector<8x8x12xf32>, vector<8x8x12xf32> -> vector<8x8x24xf32>
    "tpu.trace_start"() <{level = 10 : i32, message = "beq,bqj->bej"}> : () -> ()
    %cst_25 = arith.constant dense<0.000000e+00> : vector<8x12x24xf32>
    %45 = tpu.matmul %43, %44, %cst_25 {dimension_numbers = #tpu.dot_dimension_numbers<[2], [1], [1], [2], [0, 0, 0, 1, 1, 2], [0], [0]>} : vector<8x12x8xf32>, vector<8x8x24xf32>, vector<8x12x24xf32> -> vector<8x12x24xf32>
    "tpu.trace_stop"() : () -> ()
    %46 = vector.shape_cast %7 : vector<12x1xf32> to vector<1x12x1xf32>
    %47 = vector.broadcast %46 : vector<1x12x1xf32> to vector<8x12x24xf32>
    %48 = arith.addf %45, %47 : vector<8x12x24xf32>
    %c0_26 = arith.constant 0 : index
    %c0_27 = arith.constant 0 : index
    %c0_28 = arith.constant 0 : index
    %49 = vector.load %arg9[%c0_26, %c0_27, %c0_28] : memref<8x12x24xf32, #tpu.memory_space<vmem>>, vector<8x12x24xf32>
    tpu.vector_store %arg9[%c0_26, %c0_27, %c0_28], %48 {strides = array<i32>} : memref<8x12x24xf32, #tpu.memory_space<vmem>>, vector<8x12x24xf32>,
    return
  }
  func.func @transform_0(%arg0: i32) -> (i32, i32, i32) {
    %c0_i32 = arith.constant 0 : i32
    %c0_i32_0 = arith.constant 0 : i32
    %c0_i32_1 = arith.constant 0 : i32
    return %arg0, %c0_i32, %c0_i32_0 : i32, i32, i32
  }
  func.func @transform_1(%arg0: i32) -> (i32, i32, i32) {
    %c0_i32 = arith.constant 0 : i32
    %c0_i32_0 = arith.constant 0 : i32
    %c0_i32_1 = arith.constant 0 : i32
    return %arg0, %c0_i32, %c0_i32_0 : i32, i32, i32
  }
  func.func @transform_2(%arg0: i32) -> (i32, i32) {
    %c0_i32 = arith.constant 0 : i32
    %c0_i32_0 = arith.constant 0 : i32
    %c0_i32_1 = arith.constant 0 : i32
    return %c0_i32, %c0_i32_0 : i32, i32
  }
  func.func @transform_3(%arg0: i32) -> (i32, i32) {
    %c0_i32 = arith.constant 0 : i32
    %c0_i32_0 = arith.constant 0 : i32
    %c0_i32_1 = arith.constant 0 : i32
    return %c0_i32, %c0_i32_0 : i32, i32
  }
  func.func @transform_4(%arg0: i32) -> (i32, i32) {
    %c0_i32 = arith.constant 0 : i32
    %c0_i32_0 = arith.constant 0 : i32
    %c0_i32_1 = arith.constant 0 : i32
    return %c0_i32, %c0_i32_0 : i32, i32
  }
  func.func @transform_5(%arg0: i32) -> (i32, i32) {
    %c0_i32 = arith.constant 0 : i32
    %c0_i32_0 = arith.constant 0 : i32
    %c0_i32_1 = arith.constant 0 : i32
    return %c0_i32, %c0_i32_0 : i32, i32
  }
  func.func @transform_6(%arg0: i32) -> (i32, i32) {
    %c0_i32 = arith.constant 0 : i32
    %c0_i32_0 = arith.constant 0 : i32
    %c0_i32_1 = arith.constant 0 : i32
    return %c0_i32, %c0_i32_0 : i32, i32
  }
  func.func @transform_7(%arg0: i32) -> (i32, i32) {
    %c0_i32 = arith.constant 0 : i32
    %c0_i32_0 = arith.constant 0 : i32
    %c0_i32_1 = arith.constant 0 : i32
    return %c0_i32, %c0_i32_0 : i32, i32
  }
  func.func @transform_8(%arg0: i32) -> (i32, i32, i32) {
    %c0_i32 = arith.constant 0 : i32
    %c0_i32_0 = arith.constant 0 : i32
    %c0_i32_1 = arith.constant 0 : i32
    return %arg0, %c0_i32, %c0_i32_0 : i32, i32, i32
  }
}

</mosaic_0001>

<llo_original>
// kernel: tpu_custom_call.1
$region0: #{tpu_custom_call.1}
  #allocation0 [shape = 'u32[]', space=smem, size = 0x4, offset = 0x4, fixed_abs, tag = 'smem constant byte address 0x4 - core index']
  #allocation1 [shape = 'u32[72,128]{1,0:T(1,128)}', space=vmem, size = 0x9000, scoped, tag = 'internal scratch']
  %s0 = inlined_call_operand.vmem [shape: f32[16,8,12], index: 0, kind: input, shape index: {}]
  %s1 = inlined_call_operand.vmem [shape: f32[16,16,32], index: 1, kind: input, shape index: {}]
  %s2 = inlined_call_operand.vmem [shape: f32[12,12], index: 2, kind: input, shape index: {}]
  %s3 = inlined_call_operand.vmem [shape: f32[1,12], index: 3, kind: input, shape index: {}]
  %s4 = inlined_call_operand.vmem [shape: f32[32,12], index: 4, kind: input, shape index: {}]
  %s5 = inlined_call_operand.vmem [shape: f32[1,12], index: 5, kind: input, shape index: {}]
  %s6 = inlined_call_operand.vmem [shape: f32[16,12], index: 6, kind: input, shape index: {}]
  %s7 = inlined_call_operand.vmem [shape: f32[12,1], index: 7, kind: input, shape index: {}]
  %s8 = inlined_call_operand.vmem [shape: f32[16,12,24], index: 8, kind: output, shape index: {}]
  %s9 = sld [smem:[#allocation0]]
  $region65: #{tpu_custom_call.1} parent=0
    _
  %s11 = ssub.s32 1, %s9
  %s12 = scalar_select 0, %s11, %s9
  loop: start=0, step=1, limit=4
  $region2: #{tpu_custom_call.1} parent=0 // loop_pre_header
    _
  $region3: #{tpu_custom_call.1} parent=0 // loop_header
    %s14 = sphi 0, %s18
    %p15 = scmp.ge.s32.totalorder %s14, 4
    %s24 = sphi 0, %s26
    %s27 = sphi 0, %s24
    %s28 = sphi 0, %s27
    %s44 = sphi 0, %s28
    %s50 = sphi 0, %s52
    %s53 = sphi 0, %s50
    %s54 = sphi 0, %s53
    %s70 = sphi 0, %s54
    %s74 = sphi 0, %s74
    %s76 = sphi 0, %s74
    %s77 = sphi 0, %s76
    %s91 = sphi 0, %s77
    %s95 = sphi 0, %s95
    %s97 = sphi 0, %s95
    %s98 = sphi 0, %s97
    %s112 = sphi 0, %s98
    %s116 = sphi 0, %s116
    %s118 = sphi 0, %s116
    %s119 = sphi 0, %s118
    %s133 = sphi 0, %s119
    %s137 = sphi 0, %s137
    %s139 = sphi 0, %s137
    %s140 = sphi 0, %s139
    %s154 = sphi 0, %s140
    %s158 = sphi 0, %s158
    %s160 = sphi 0, %s158
    %s161 = sphi 0, %s160
    %s175 = sphi 0, %s161
    %s179 = sphi 0, %s179
    %s181 = sphi 0, %s179
    %s182 = sphi 0, %s181
    %s196 = sphi 0, %s182
    %s202 = sphi 0, %s204
    %s205 = sphi 0, %s202
    %s206 = sphi 0, %s205
    %s222 = sphi 0, %s206
  $region4: #{tpu_custom_call.1} parent=0 // loop_header_branch
    %17 = sbr.rel (%p15) target = $region8
  $region5: #{tpu_custom_call.1} parent=0 // loop_body
    %s19 = ssub.s32 %s14, 1
    %s20 = ssub.s32 %s14, 2
    %s21 = sadd.s32 %s14, 1
    %s22 = ssub.s32 %s14, %s21
    %p23 = scmp.eq.s32.totalorder %s22, 0
    %s25 = sadd.s32 %s24, 1
    %s26 = scalar_select %p23, %s24, %s25
    %p29 = pneg %p23
    %p30 = scmp.eq.s32.totalorder %s14, 1
    %p31 = por %p29, %p30
    %p32 = scmp.ne.s32.totalorder %s24, %s27
    %p33 = scmp.eq.s32.totalorder %s14, 0
    %p34 = por %p32, %p33
    %p35 = scmp.ne.s32.totalorder %s24, %s27
    %p36 = scmp.eq.s32.totalorder %s19, 1
    %p37 = por %p35, %p36
    %p38 = scmp.ne.s32.totalorder %s27, %s28
    %p39 = scmp.eq.s32.totalorder %s19, 0
    %p40 = por %p38, %p39
    %p41 = scmp.ne.s32.totalorder %s27, %s28
    %p42 = scmp.eq.s32.totalorder %s20, 1
    %p43 = por %p41, %p42
    %p45 = scmp.ne.s32.totalorder %s28, %s44
    %p46 = scmp.eq.s32.totalorder %s20, 0
    %p47 = por %p45, %p46
    %s48 = ssub.s32 %s14, %s21
    %p49 = scmp.eq.s32.totalorder %s48, 0
    %s51 = sadd.s32 %s50, 1
    %s52 = scalar_select %p49, %s50, %s51
    %p55 = pneg %p49
    %p56 = scmp.eq.s32.totalorder %s14, 1
    %p57 = por %p55, %p56
    %p58 = scmp.ne.s32.totalorder %s50, %s53
    %p59 = scmp.eq.s32.totalorder %s14, 0
    %p60 = por %p58, %p59
    %p61 = scmp.ne.s32.totalorder %s50, %s53
    %p62 = scmp.eq.s32.totalorder %s19, 1
    %p63 = por %p61, %p62
    %p64 = scmp.ne.s32.totalorder %s53, %s54
    %p65 = scmp.eq.s32.totalorder %s19, 0
    %p66 = por %p64, %p65
    %p67 = scmp.ne.s32.totalorder %s53, %s54
    %p68 = scmp.eq.s32.totalorder %s20, 1
    %p69 = por %p67, %p68
    %p71 = scmp.ne.s32.totalorder %s54, %s70
    %p72 = scmp.eq.s32.totalorder %s20, 0
    %p73 = por %p71, %p72
    %s75 = sadd.s32 %s74, 1
    %p78 = scmp.eq.s32.totalorder %s14, 1
    %p79 = scmp.ne.s32.totalorder %s74, %s76
    %p80 = scmp.eq.s32.totalorder %s14, 0
    %p81 = por %p79, %p80
    %p82 = scmp.ne.s32.totalorder %s74, %s76
    %p83 = scmp.eq.s32.totalorder %s19, 1
    %p84 = por %p82, %p83
    %p85 = scmp.ne.s32.totalorder %s76, %s77
    %p86 = scmp.eq.s32.totalorder %s19, 0
    %p87 = por %p85, %p86
    %p88 = scmp.ne.s32.totalorder %s76, %s77
    %p89 = scmp.eq.s32.totalorder %s20, 1
    %p90 = por %p88, %p89
    %p92 = scmp.ne.s32.totalorder %s77, %s91
    %p93 = scmp.eq.s32.totalorder %s20, 0
    %p94 = por %p92, %p93
    %s96 = sadd.s32 %s95, 1
    %p99 = scmp.eq.s32.totalorder %s14, 1
    %p100 = scmp.ne.s32.totalorder %s95, %s97
    %p101 = scmp.eq.s32.totalorder %s14, 0
    %p102 = por %p100, %p101
    %p103 = scmp.ne.s32.totalorder %s95, %s97
    %p104 = scmp.eq.s32.totalorder %s19, 1
    %p105 = por %p103, %p104
    %p106 = scmp.ne.s32.totalorder %s97, %s98
    %p107 = scmp.eq.s32.totalorder %s19, 0
    %p108 = por %p106, %p107
    %p109 = scmp.ne.s32.totalorder %s97, %s98
    %p110 = scmp.eq.s32.totalorder %s20, 1
    %p111 = por %p109, %p110
    %p113 = scmp.ne.s32.totalorder %s98, %s112
    %p114 = scmp.eq.s32.totalorder %s20, 0
    %p115 = por %p113, %p114
    %s117 = sadd.s32 %s116, 1
    %p120 = scmp.eq.s32.totalorder %s14, 1
    %p121 = scmp.ne.s32.totalorder %s116, %s118
    %p122 = scmp.eq.s32.totalorder %s14, 0
    %p123 = por %p121, %p122
    %p124 = scmp.ne.s32.totalorder %s116, %s118
    %p125 = scmp.eq.s32.totalorder %s19, 1
    %p126 = por %p124, %p125
    %p127 = scmp.ne.s32.totalorder %s118, %s119
    %p128 = scmp.eq.s32.totalorder %s19, 0
    %p129 = por %p127, %p128
    %p130 = scmp.ne.s32.totalorder %s118, %s119
    %p131 = scmp.eq.s32.totalorder %s20, 1
    %p132 = por %p130, %p131
    %p134 = scmp.ne.s32.totalorder %s119, %s133
    %p135 = scmp.eq.s32.totalorder %s20, 0
    %p136 = por %p134, %p135
    %s138 = sadd.s32 %s137, 1
    %p141 = scmp.eq.s32.totalorder %s14, 1
    %p142 = scmp.ne.s32.totalorder %s137, %s139
    %p143 = scmp.eq.s32.totalorder %s14, 0
    %p144 = por %p142, %p143
    %p145 = scmp.ne.s32.totalorder %s137, %s139
    %p146 = scmp.eq.s32.totalorder %s19, 1
    %p147 = por %p145, %p146
    %p148 = scmp.ne.s32.totalorder %s139, %s140
    %p149 = scmp.eq.s32.totalorder %s19, 0
    %p150 = por %p148, %p149
    %p151 = scmp.ne.s32.totalorder %s139, %s140
    %p152 = scmp.eq.s32.totalorder %s20, 1
    %p153 = por %p151, %p152
    %p155 = scmp.ne.s32.totalorder %s140, %s154
    %p156 = scmp.eq.s32.totalorder %s20, 0
    %p157 = por %p155, %p156
    %s159 = sadd.s32 %s158, 1
    %p162 = scmp.eq.s32.totalorder %s14, 1
    %p163 = scmp.ne.s32.totalorder %s158, %s160
    %p164 = scmp.eq.s32.totalorder %s14, 0
    %p165 = por %p163, %p164
    %p166 = scmp.ne.s32.totalorder %s158, %s160
    %p167 = scmp.eq.s32.totalorder %s19, 1
    %p168 = por %p166, %p167
    %p169 = scmp.ne.s32.totalorder %s160, %s161
    %p170 = scmp.eq.s32.totalorder %s19, 0
    %p171 = por %p169, %p170
    %p172 = scmp.ne.s32.totalorder %s160, %s161
    %p173 = scmp.eq.s32.totalorder %s20, 1
    %p174 = por %p172, %p173
    %p176 = scmp.ne.s32.totalorder %s161, %s175
    %p177 = scmp.eq.s32.totalorder %s20, 0
    %p178 = por %p176, %p177
    %s180 = sadd.s32 %s179, 1
    %p183 = scmp.eq.s32.totalorder %s14, 1
    %p184 = scmp.ne.s32.totalorder %s179, %s181
    %p185 = scmp.eq.s32.totalorder %s14, 0
    %p186 = por %p184, %p185
    %p187 = scmp.ne.s32.totalorder %s179, %s181
    %p188 = scmp.eq.s32.totalorder %s19, 1
    %p189 = por %p187, %p188
    %p190 = scmp.ne.s32.totalorder %s181, %s182
    %p191 = scmp.eq.s32.totalorder %s19, 0
    %p192 = por %p190, %p191
    %p193 = scmp.ne.s32.totalorder %s181, %s182
    %p194 = scmp.eq.s32.totalorder %s20, 1
    %p195 = por %p193, %p194
    %p197 = scmp.ne.s32.totalorder %s182, %s196
    %p198 = scmp.eq.s32.totalorder %s20, 0
    %p199 = por %p197, %p198
    %s200 = ssub.s32 %s14, %s21
    %p201 = scmp.eq.s32.totalorder %s200, 0
    %s203 = sadd.s32 %s202, 1
    %s204 = scalar_select %p201, %s202, %s203
    %p207 = pneg %p201
    %p208 = scmp.eq.s32.totalorder %s14, 1
    %p209 = por %p207, %p208
    %p210 = scmp.ne.s32.totalorder %s202, %s205
    %p211 = scmp.eq.s32.totalorder %s14, 0
    %p212 = por %p210, %p211
    %p213 = scmp.ne.s32.totalorder %s202, %s205
    %p214 = scmp.eq.s32.totalorder %s19, 1
    %p215 = por %p213, %p214
    %p216 = scmp.ne.s32.totalorder %s205, %s206
    %p217 = scmp.eq.s32.totalorder %s19, 0
    %p218 = por %p216, %p217
    %p219 = scmp.ne.s32.totalorder %s205, %s206
    %p220 = scmp.eq.s32.totalorder %s20, 1
    %p221 = por %p219, %p220
    %p223 = scmp.ne.s32.totalorder %s206, %s222
    %p224 = scmp.eq.s32.totalorder %s20, 0
    %p225 = por %p223, %p224
    %p226 = scmp.le.s32.totalorder 1, %s14
    %p227 = scmp.lt.s32.totalorder %s14, 3
    %p228 = pnand %p226, %p227
    %p229 = pneg %p228
    // Predicated region
    $region9: #{tpu_custom_call.1} parent=5 // pred_check
      _
    $region10: #{tpu_custom_call.1} parent=5 // pred_check_branch
      %231 = sbr.rel (%p228) target = $region12
    $region11: #{tpu_custom_call.1} parent=5 // pred_region
      %s232 = ssub.s32 %s14, 1
      // Predicated region
      $region13: #{tpu_custom_call.1} parent=11 // pred_check
        %p233 = pneg %p87
      $region14: #{tpu_custom_call.1} parent=11 // pred_check_branch
        %235 = sbr.rel (%p233) target = $region16
      $region15: #{tpu_custom_call.1} parent=11 // pred_region
        _
      $region16: #{tpu_custom_call.1} parent=11 // pred_fallthru
        _
      // Predicated region
      $region17: #{tpu_custom_call.1} parent=11 // pred_check
        %p236 = pneg %p108
      $region18: #{tpu_custom_call.1} parent=11 // pred_check_branch
        %238 = sbr.rel (%p236) target = $region20
      $region19: #{tpu_custom_call.1} parent=11 // pred_region
        _
      $region20: #{tpu_custom_call.1} parent=11 // pred_fallthru
        _
      // Predicated region
      $region21: #{tpu_custom_call.1} parent=11 // pred_check
        %p239 = pneg %p129
      $region22: #{tpu_custom_call.1} parent=11 // pred_check_branch
        %241 = sbr.rel (%p239) target = $region24
      $region23: #{tpu_custom_call.1} parent=11 // pred_region
        _
      $region24: #{tpu_custom_call.1} parent=11 // pred_fallthru
        _
      // Predicated region
      $region25: #{tpu_custom_call.1} parent=11 // pred_check
        %p242 = pneg %p150
      $region26: #{tpu_custom_call.1} parent=11 // pred_check_branch
        %244 = sbr.rel (%p242) target = $region28
      $region27: #{tpu_custom_call.1} parent=11 // pred_region
        _
      $region28: #{tpu_custom_call.1} parent=11 // pred_fallthru
        _
      // Predicated region
      $region29: #{tpu_custom_call.1} parent=11 // pred_check
        %p245 = pneg %p171
      $region30: #{tpu_custom_call.1} parent=11 // pred_check_branch
        %247 = sbr.rel (%p245) target = $region32
      $region31: #{tpu_custom_call.1} parent=11 // pred_region
        _
      $region32: #{tpu_custom_call.1} parent=11 // pred_fallthru
        _
      // Predicated region
      $region33: #{tpu_custom_call.1} parent=11 // pred_check
        %p248 = pneg %p192
      $region34: #{tpu_custom_call.1} parent=11 // pred_check_branch
        %250 = sbr.rel (%p248) target = $region36
      $region35: #{tpu_custom_call.1} parent=11 // pred_region
        _
      $region36: #{tpu_custom_call.1} parent=11 // pred_fallthru
        _
    $region12: #{tpu_custom_call.1} parent=5 // pred_fallthru
      _
    %p251 = scmp.lt.s32.totalorder %s14, 2
    // Predicated region
    $region37: #{tpu_custom_call.1} parent=5 // pred_check
      %p252 = pneg %p251
    $region38: #{tpu_custom_call.1} parent=5 // pred_check_branch
      %254 = sbr.rel (%p252) target = $region40
    $region39: #{tpu_custom_call.1} parent=5 // pred_region
      // Predicated region
      $region41: #{tpu_custom_call.1} parent=39 // pred_check
        %p255 = pneg %p34
      $region42: #{tpu_custom_call.1} parent=39 // pred_check_branch
        %257 = sbr.rel (%p255) target = $region44
      $region43: #{tpu_custom_call.1} parent=39 // pred_region
        %s258 = smul.u32 8, %s14
        %p259 = scmp.lt.s32.totalorder %s258, 15
        %s260 = scalar_select %p259, %s258, 15
        %s261 = smul.addr %s260, 8
        %s262 = scalar_lea.vmem %s0, %s261
        %s263 = smul.u32 8, %s14
      $region44: #{tpu_custom_call.1} parent=39 // pred_fallthru
        _
      // Predicated region
      $region45: #{tpu_custom_call.1} parent=39 // pred_check
        %p264 = pneg %p60
      $region46: #{tpu_custom_call.1} parent=39 // pred_check_branch
        %266 = sbr.rel (%p264) target = $region48
      $region47: #{tpu_custom_call.1} parent=39 // pred_region
        %s267 = smul.u32 8, %s14
        %p268 = scmp.lt.s32.totalorder %s267, 15
        %s269 = scalar_select %p268, %s267, 15
        %s270 = smul.addr %s269, 2
        %s271 = smul.addr %s270, 8
        %s272 = scalar_lea.vmem %s1, %s271
        %s273 = smul.u32 8, %s14
      $region48: #{tpu_custom_call.1} parent=39 // pred_fallthru
        _
    $region40: #{tpu_custom_call.1} parent=5 // pred_fallthru
      _
    %p274 = scmp.le.s32.totalorder 1, %s14
    %p275 = scmp.lt.s32.totalorder %s14, 3
    %p276 = pnand %p274, %p275
    %p277 = pneg %p276
    // Predicated region
    $region49: #{tpu_custom_call.1} parent=5 // pred_check
      _
    $region50: #{tpu_custom_call.1} parent=5 // pred_check_branch
      %279 = sbr.rel (%p276) target = $region52
    $region51: #{tpu_custom_call.1} parent=5 // pred_region
      %s280 = ssub.s32 %s14, 1
      %s281 = smul.u32 8, %s19
      %p282 = scmp.lt.s32.totalorder %s281, 15
      %s283 = scalar_select %p282, %s281, 15
      %s284 = smul.addr %s283, 8
      %s285 = scalar_lea.vmem %s0, %s284
      %p286 = pneg %p40
      %p287 = pneg %p37
      %s288 = smul.u32 8, %s19
      %p289 = scmp.lt.s32.totalorder %s288, 15
      %s290 = scalar_select %p289, %s288, 15
      %s291 = smul.addr %s290, 2
      %s292 = smul.addr %s291, 8
      %s293 = scalar_lea.vmem %s1, %s292
      %p294 = pneg %p66
      %p295 = pneg %p63
      %p296 = pneg %p87
      %p297 = pneg %p84
      %p298 = pneg %p108
      %p299 = pneg %p105
      %p300 = pneg %p129
      %p301 = pneg %p126
      %p302 = pneg %p150
      %p303 = pneg %p147
      %p304 = pneg %p171
      %p305 = pneg %p168
      %p306 = pneg %p192
      %p307 = pneg %p189
      %p308 = pneg %p218
      %p309 = pneg %p215
      %s310 = smul.u32 8, %s19
      %p311 = scmp.lt.s32.totalorder %s310, 15
      %s312 = scalar_select %p311, %s310, 15
      %s313 = smul.addr %s312, 2
      %s314 = smul.addr %s313, 8
      %s315 = scalar_lea.vmem %s8, %s314
      %s316 = smul.u32 8, %s19
      %p317 = scmp.lt.s32.totalorder %s316, 15
      %s318 = scalar_select %p317, %s316, 15
      %s319 = smul.addr %s318, 8
      %s320 = scalar_lea.vmem %s0, %s319
      %s321 = smul.u32 8, %s19
      %s322 = smul.u32 8, %s19
      %p323 = scmp.lt.s32.totalorder %s322, 15
      %s324 = scalar_select %p323, %s322, 15
      %s325 = smul.addr %s324, 2
      %s326 = smul.addr %s325, 8
      %s327 = scalar_lea.vmem %s1, %s326
      %s328 = smul.u32 8, %s19
      %s329 = smul.u32 8, %s19
      %p330 = scmp.lt.s32.totalorder %s329, 15
      %s331 = scalar_select %p330, %s329, 15
      %s332 = smul.addr %s331, 2
      %s333 = smul.addr %s332, 8
      %s334 = scalar_lea.vmem %s8, %s333
      %s335 = smul.u32 8, %s19
      %v336 = vld [vmem:[%s320] sm:$0xff]
      %v337 = vld [vmem:[%s320 + $0x8] sm:$0xff]
      %v338 = vld [vmem:[%s320 + $0x10] sm:$0xff]
      %v339 = vld [vmem:[%s320 + $0x18] sm:$0xff]
      %v340 = vld [vmem:[%s320 + $0x20] sm:$0xff]
      %v341 = vld [vmem:[%s320 + $0x28] sm:$0xff]
      %v342 = vld [vmem:[%s320 + $0x30] sm:$0xff]
      %v343 = vld [vmem:[%s320 + $0x38] sm:$0xff]
      %v344 = vld [vmem:[%s327] sm:$0xff]
      %v345 = vld [vmem:[%s327 + $0x8] sm:$0xff]
      %v346 = vld [vmem:[%s327 + $0x10] sm:$0xff]
      %v347 = vld [vmem:[%s327 + $0x18] sm:$0xff]
      %v348 = vld [vmem:[%s327 + $0x20] sm:$0xff]
      %v349 = vld [vmem:[%s327 + $0x28] sm:$0xff]
      %v350 = vld [vmem:[%s327 + $0x30] sm:$0xff]
      %v351 = vld [vmem:[%s327 + $0x38] sm:$0xff]
      %v352 = vld [vmem:[%s327 + $0x40] sm:$0xff]
      %v353 = vld [vmem:[%s327 + $0x48] sm:$0xff]
      %v354 = vld [vmem:[%s327 + $0x50] sm:$0xff]
      %v355 = vld [vmem:[%s327 + $0x58] sm:$0xff]
      %v356 = vld [vmem:[%s327 + $0x60] sm:$0xff]
      %v357 = vld [vmem:[%s327 + $0x68] sm:$0xff]
      %v358 = vld [vmem:[%s327 + $0x70] sm:$0xff]
      %v359 = vld [vmem:[%s327 + $0x78] sm:$0xff]
      %v360 = vld [vmem:[%s2] sm:$0xff]
      %v361 = vld [vmem:[%s2 + $0x8] sm:$0xf]
      %v362 = vld [vmem:[%s4] sm:$0xff]
      %v363 = vld [vmem:[%s4 + $0x8] sm:$0xff]
      %v364 = vld [vmem:[%s4 + $0x10] sm:$0xff]
      %v365 = vld [vmem:[%s4 + $0x18] sm:$0xff]
      %v366 = vld [vmem:[%s6] sm:$0xff]
      %v367 = vld [vmem:[%s6 + $0x8] sm:$0xff]
      %v368 = vld [vmem:[%s3] sm:$0x1]
      %v369 = vld [vmem:[%s5] sm:$0x1]
      %v370 = vld [vmem:[%s7] sm:$0xff]
      %v371 = vld [vmem:[%s7 + $0x8] sm:$0xf]
      %v373 = vperm.slane %v368, 0
      %vm375 = vcmask 97280
      %v377 = vsel %vm375, %v336, 0
      %v380 = vsel %vm375, %v337, 0
      %v383 = vsel %vm375, %v338, 0
      %v386 = vsel %vm375, %v339, 0
      %v389 = vsel %vm375, %v340, 0
      %v392 = vsel %vm375, %v341, 0
      %v395 = vsel %vm375, %v342, 0
      %v398 = vsel %vm375, %v343, 0
      %vm400 = vcmask 1043456
      %v402 = vsel %vm400, %v361, 0
      %404 = vmatpush.msra.mxu0 0.0
      %405 = vmatpush.msra.mxu0 0.0
      %406 = vmatpush.msra.mxu0 0.0
      %407 = vmatpush.msra.mxu0 0.0
      %408 = vmatpush.msra.mxu0 0.0
      %409 = vmatpush.msra.mxu0 0.0
      %410 = vmatpush.msra.mxu0 0.0
      %411 = vmatpush.msra.mxu0 0.0
      %412 = vmatpush.msra.mxu0 0.0
      %413 = vmatpush.msra.mxu0 0.0
      %414 = vmatpush.msra.mxu0 0.0
      %415 = vmatpush.msra.mxu0 0.0
      %416 = vmatpush.msra.mxu0 0.0
      %417 = vmatpush.msra.mxu0 0.0
      %418 = vmatpush.msra.mxu0 %v402
      %419 = vmatpush.msra.mxu0 %v360
      %420 = vmatmul.f32.gmra.mxu0 %v377
      %v421 = vpop.f32.mrf.mxu0
      %v422 = vadd.f32 %v373, %v421
      %423 = vmatmul.f32.gmra.mxu0 %v380
      %v424 = vpop.f32.mrf.mxu0
      %v425 = vadd.f32 %v373, %v424
      %426 = vmatmul.f32.gmra.mxu0 %v383
      %v427 = vpop.f32.mrf.mxu0
      %v428 = vadd.f32 %v373, %v427
      %429 = vmatmul.f32.gmra.mxu0 %v386
      %v430 = vpop.f32.mrf.mxu0
      %v431 = vadd.f32 %v373, %v430
      %432 = vmatmul.f32.gmra.mxu0 %v389
      %v433 = vpop.f32.mrf.mxu0
      %v434 = vadd.f32 %v373, %v433
      %435 = vmatmul.f32.gmra.mxu0 %v392
      %v436 = vpop.f32.mrf.mxu0
      %v437 = vadd.f32 %v373, %v436
      %438 = vmatmul.f32.gmra.mxu0 %v395
      %v439 = vpop.f32.mrf.mxu0
      %v440 = vadd.f32 %v373, %v439
      %441 = vmatmul.f32.gmra.mxu0 %v398
      %v442 = vpop.f32.mrf.mxu0
      %v443 = vadd.f32 %v373, %v442
      %444 = vdwg.mxu0
      %v446 = vperm.slane %v369, 0
      %vm448 = vcmask 261120
      %v450 = vsel %vm448, %v344, 0
      %v453 = vsel %vm448, %v345, 0
      %v456 = vsel %vm448, %v346, 0
      %v459 = vsel %vm448, %v347, 0
      %v462 = vsel %vm448, %v348, 0
      %v465 = vsel %vm448, %v349, 0
      %v468 = vsel %vm448, %v350, 0
      %v471 = vsel %vm448, %v351, 0
      %v474 = vsel %vm448, %v352, 0
      %v477 = vsel %vm448, %v353, 0
      %v480 = vsel %vm448, %v354, 0
      %v483 = vsel %vm448, %v355, 0
      %v486 = vsel %vm448, %v356, 0
      %v489 = vsel %vm448, %v357, 0
      %v492 = vsel %vm448, %v358, 0
      %v495 = vsel %vm448, %v359, 0
      %497 = vmatpush.msra.mxu0 0.0
      %498 = vmatpush.msra.mxu0 0.0
      %499 = vmatpush.msra.mxu0 0.0
      %500 = vmatpush.msra.mxu0 0.0
      %501 = vmatpush.msra.mxu0 0.0
      %502 = vmatpush.msra.mxu0 0.0
      %503 = vmatpush.msra.mxu0 0.0
      %504 = vmatpush.msra.mxu0 0.0
      %505 = vmatpush.msra.mxu0 0.0
      %506 = vmatpush.msra.mxu0 0.0
      %507 = vmatpush.msra.mxu0 0.0
      %508 = vmatpush.msra.mxu0 0.0
      %509 = vmatpush.msra.mxu0 %v365
      %510 = vmatpush.msra.mxu0 %v364
      %511 = vmatpush.msra.mxu0 %v363
      %512 = vmatpush.msra.mxu0 %v362
      %513 = vmatmul.f32.gmra.mxu0 %v450
      %v514 = vpop.f32.mrf.mxu0
      %v515 = vadd.f32 %v446, %v514
      %516 = vmatmul.f32.gmra.mxu0 %v453
      %v517 = vpop.f32.mrf.mxu0
      %v518 = vadd.f32 %v446, %v517
      %519 = vmatmul.f32.gmra.mxu0 %v456
      %v520 = vpop.f32.mrf.mxu0
      %v521 = vadd.f32 %v446, %v520
      %522 = vmatmul.f32.gmra.mxu0 %v459
      %v523 = vpop.f32.mrf.mxu0
      %v524 = vadd.f32 %v446, %v523
      %525 = vmatmul.f32.gmra.mxu0 %v462
      %v526 = vpop.f32.mrf.mxu0
      %v527 = vadd.f32 %v446, %v526
      %528 = vmatmul.f32.gmra.mxu0 %v465
      %v529 = vpop.f32.mrf.mxu0
      %v530 = vadd.f32 %v446, %v529
      %531 = vmatmul.f32.gmra.mxu0 %v468
      %v532 = vpop.f32.mrf.mxu0
      %v533 = vadd.f32 %v446, %v532
      %534 = vmatmul.f32.gmra.mxu0 %v471
      %v535 = vpop.f32.mrf.mxu0
      %v536 = vadd.f32 %v446, %v535
      %537 = vmatmul.f32.gmra.mxu0 %v474
      %v538 = vpop.f32.mrf.mxu0
      %v539 = vadd.f32 %v446, %v538
      %540 = vmatmul.f32.gmra.mxu0 %v477
      %v541 = vpop.f32.mrf.mxu0
      %v542 = vadd.f32 %v446, %v541
      %543 = vmatmul.f32.gmra.mxu0 %v480
      %v544 = vpop.f32.mrf.mxu0
      %v545 = vadd.f32 %v446, %v544
      %546 = vmatmul.f32.gmra.mxu0 %v483
      %v547 = vpop.f32.mrf.mxu0
      %v548 = vadd.f32 %v446, %v547
      %549 = vmatmul.f32.gmra.mxu0 %v486
      %v550 = vpop.f32.mrf.mxu0
      %v551 = vadd.f32 %v446, %v550
      %552 = vmatmul.f32.gmra.mxu0 %v489
      %v553 = vpop.f32.mrf.mxu0
      %v554 = vadd.f32 %v446, %v553
      %555 = vmatmul.f32.gmra.mxu0 %v492
      %v556 = vpop.f32.mrf.mxu0
      %v557 = vadd.f32 %v446, %v556
      %558 = vmatmul.f32.gmra.mxu0 %v495
      %v559 = vpop.f32.mrf.mxu0
      %v560 = vadd.f32 %v446, %v559
      %561 = vdwg.mxu0
      %v563 = vsel %vm375, %v422, 0
      %v566 = vsel %vm375, %v515, 0
      %v569 = vsel %vm375, %v518, 0
      %571 = vmatpush.xpose.msra.mxu0 0.0
      %572 = vmatpush.xpose.msra.mxu0 0.0
      %573 = vmatpush.xpose.msra.mxu0 0.0
      %574 = vmatpush.xpose.msra.mxu0 0.0
      %575 = vmatpush.xpose.msra.mxu0 0.0
      %576 = vmatpush.xpose.msra.mxu0 0.0
      %577 = vmatpush.xpose.msra.mxu0 0.0
      %578 = vmatpush.xpose.msra.mxu0 0.0
      %579 = vmatpush.xpose.msra.mxu0 0.0
      %580 = vmatpush.xpose.msra.mxu0 0.0
      %581 = vmatpush.xpose.msra.mxu0 0.0
      %582 = vmatpush.xpose.msra.mxu0 0.0
      %583 = vmatpush.xpose.msra.mxu0 0.0
      %584 = vmatpush.xpose.msra.mxu0 0.0
      %585 = vmatpush.xpose.msra.mxu0 %v569
      %586 = vmatpush.xpose.msra.mxu0 %v566
      %587 = vmatmul.f32.gmra.mxu0 %v563
      %v588 = vpop.f32.mrf.mxu0
      %v589 = vadd.f32 0.0, %v588
      %590 = vdwg.mxu0
      %v592 = vsel %vm375, %v425, 0
      %v595 = vsel %vm375, %v521, 0
      %v598 = vsel %vm375, %v524, 0
      %600 = vmatpush.xpose.msra.mxu0 0.0
      %601 = vmatpush.xpose.msra.mxu0 0.0
      %602 = vmatpush.xpose.msra.mxu0 0.0
      %603 = vmatpush.xpose.msra.mxu0 0.0
      %604 = vmatpush.xpose.msra.mxu0 0.0
      %605 = vmatpush.xpose.msra.mxu0 0.0
      %606 = vmatpush.xpose.msra.mxu0 0.0
      %607 = vmatpush.xpose.msra.mxu0 0.0
      %608 = vmatpush.xpose.msra.mxu0 0.0
      %609 = vmatpush.xpose.msra.mxu0 0.0
      %610 = vmatpush.xpose.msra.mxu0 0.0
      %611 = vmatpush.xpose.msra.mxu0 0.0
      %612 = vmatpush.xpose.msra.mxu0 0.0
      %613 = vmatpush.xpose.msra.mxu0 0.0
      %614 = vmatpush.xpose.msra.mxu0 %v598
      %615 = vmatpush.xpose.msra.mxu0 %v595
      %616 = vmatmul.f32.gmra.mxu0 %v592
      %v617 = vpop.f32.mrf.mxu0
      %v618 = vadd.f32 0.0, %v617
      %619 = vdwg.mxu0
      %v621 = vsel %vm375, %v428, 0
      %v624 = vsel %vm375, %v527, 0
      %v627 = vsel %vm375, %v530, 0
      %629 = vmatpush.xpose.msra.mxu0 0.0
      %630 = vmatpush.xpose.msra.mxu0 0.0
      %631 = vmatpush.xpose.msra.mxu0 0.0
      %632 = vmatpush.xpose.msra.mxu0 0.0
      %633 = vmatpush.xpose.msra.mxu0 0.0
      %634 = vmatpush.xpose.msra.mxu0 0.0
      %635 = vmatpush.xpose.msra.mxu0 0.0
      %636 = vmatpush.xpose.msra.mxu0 0.0
      %637 = vmatpush.xpose.msra.mxu0 0.0
      %638 = vmatpush.xpose.msra.mxu0 0.0
      %639 = vmatpush.xpose.msra.mxu0 0.0
      %640 = vmatpush.xpose.msra.mxu0 0.0
      %641 = vmatpush.xpose.msra.mxu0 0.0
      %642 = vmatpush.xpose.msra.mxu0 0.0
      %643 = vmatpush.xpose.msra.mxu0 %v627
      %644 = vmatpush.xpose.msra.mxu0 %v624
      %645 = vmatmul.f32.gmra.mxu0 %v621
      %v646 = vpop.f32.mrf.mxu0
      %v647 = vadd.f32 0.0, %v646
      %648 = vdwg.mxu0
      %v650 = vsel %vm375, %v431, 0
      %v653 = vsel %vm375, %v533, 0
      %v656 = vsel %vm375, %v536, 0
      %658 = vmatpush.xpose.msra.mxu0 0.0
      %659 = vmatpush.xpose.msra.mxu0 0.0
      %660 = vmatpush.xpose.msra.mxu0 0.0
      %661 = vmatpush.xpose.msra.mxu0 0.0
      %662 = vmatpush.xpose.msra.mxu0 0.0
      %663 = vmatpush.xpose.msra.mxu0 0.0
      %664 = vmatpush.xpose.msra.mxu0 0.0
      %665 = vmatpush.xpose.msra.mxu0 0.0
      %666 = vmatpush.xpose.msra.mxu0 0.0
      %667 = vmatpush.xpose.msra.mxu0 0.0
      %668 = vmatpush.xpose.msra.mxu0 0.0
      %669 = vmatpush.xpose.msra.mxu0 0.0
      %670 = vmatpush.xpose.msra.mxu0 0.0
      %671 = vmatpush.xpose.msra.mxu0 0.0
      %672 = vmatpush.xpose.msra.mxu0 %v656
      %673 = vmatpush.xpose.msra.mxu0 %v653
      %674 = vmatmul.f32.gmra.mxu0 %v650
      %v675 = vpop.f32.mrf.mxu0
      %v676 = vadd.f32 0.0, %v675
      %677 = vdwg.mxu0
      %v679 = vsel %vm375, %v434, 0
      %v682 = vsel %vm375, %v539, 0
      %v685 = vsel %vm375, %v542, 0
      %687 = vmatpush.xpose.msra.mxu0 0.0
      %688 = vmatpush.xpose.msra.mxu0 0.0
      %689 = vmatpush.xpose.msra.mxu0 0.0
      %690 = vmatpush.xpose.msra.mxu0 0.0
      %691 = vmatpush.xpose.msra.mxu0 0.0
      %692 = vmatpush.xpose.msra.mxu0 0.0
      %693 = vmatpush.xpose.msra.mxu0 0.0
      %694 = vmatpush.xpose.msra.mxu0 0.0
      %695 = vmatpush.xpose.msra.mxu0 0.0
      %696 = vmatpush.xpose.msra.mxu0 0.0
      %697 = vmatpush.xpose.msra.mxu0 0.0
      %698 = vmatpush.xpose.msra.mxu0 0.0
      %699 = vmatpush.xpose.msra.mxu0 0.0
      %700 = vmatpush.xpose.msra.mxu0 0.0
      %701 = vmatpush.xpose.msra.mxu0 %v685
      %702 = vmatpush.xpose.msra.mxu0 %v682
      %703 = vmatmul.f32.gmra.mxu0 %v679
      %v704 = vpop.f32.mrf.mxu0
      %v705 = vadd.f32 0.0, %v704
      %706 = vdwg.mxu0
      %v708 = vsel %vm375, %v437, 0
      %v711 = vsel %vm375, %v545, 0
      %v714 = vsel %vm375, %v548, 0
      %716 = vmatpush.xpose.msra.mxu0 0.0
      %717 = vmatpush.xpose.msra.mxu0 0.0
      %718 = vmatpush.xpose.msra.mxu0 0.0
      %719 = vmatpush.xpose.msra.mxu0 0.0
      %720 = vmatpush.xpose.msra.mxu0 0.0
      %721 = vmatpush.xpose.msra.mxu0 0.0
      %722 = vmatpush.xpose.msra.mxu0 0.0
      %723 = vmatpush.xpose.msra.mxu0 0.0
      %724 = vmatpush.xpose.msra.mxu0 0.0
      %725 = vmatpush.xpose.msra.mxu0 0.0
      %726 = vmatpush.xpose.msra.mxu0 0.0
      %727 = vmatpush.xpose.msra.mxu0 0.0
      %728 = vmatpush.xpose.msra.mxu0 0.0
      %729 = vmatpush.xpose.msra.mxu0 0.0
      %730 = vmatpush.xpose.msra.mxu0 %v714
      %731 = vmatpush.xpose.msra.mxu0 %v711
      %732 = vmatmul.f32.gmra.mxu0 %v708
      %v733 = vpop.f32.mrf.mxu0
      %v734 = vadd.f32 0.0, %v733
      %735 = vdwg.mxu0
      %v737 = vsel %vm375, %v440, 0
      %v740 = vsel %vm375, %v551, 0
      %v743 = vsel %vm375, %v554, 0
      %745 = vmatpush.xpose.msra.mxu0 0.0
      %746 = vmatpush.xpose.msra.mxu0 0.0
      %747 = vmatpush.xpose.msra.mxu0 0.0
      %748 = vmatpush.xpose.msra.mxu0 0.0
      %749 = vmatpush.xpose.msra.mxu0 0.0
      %750 = vmatpush.xpose.msra.mxu0 0.0
      %751 = vmatpush.xpose.msra.mxu0 0.0
      %752 = vmatpush.xpose.msra.mxu0 0.0
      %753 = vmatpush.xpose.msra.mxu0 0.0
      %754 = vmatpush.xpose.msra.mxu0 0.0
      %755 = vmatpush.xpose.msra.mxu0 0.0
      %756 = vmatpush.xpose.msra.mxu0 0.0
      %757 = vmatpush.xpose.msra.mxu0 0.0
      %758 = vmatpush.xpose.msra.mxu0 0.0
      %759 = vmatpush.xpose.msra.mxu0 %v743
      %760 = vmatpush.xpose.msra.mxu0 %v740
      %761 = vmatmul.f32.gmra.mxu0 %v737
      %v762 = vpop.f32.mrf.mxu0
      %v763 = vadd.f32 0.0, %v762
      %764 = vdwg.mxu0
      %v766 = vsel %vm375, %v443, 0
      %v769 = vsel %vm375, %v557, 0
      %v772 = vsel %vm375, %v560, 0
      %774 = vmatpush.xpose.msra.mxu0 0.0
      %775 = vmatpush.xpose.msra.mxu0 0.0
      %776 = vmatpush.xpose.msra.mxu0 0.0
      %777 = vmatpush.xpose.msra.mxu0 0.0
      %778 = vmatpush.xpose.msra.mxu0 0.0
      %779 = vmatpush.xpose.msra.mxu0 0.0
      %780 = vmatpush.xpose.msra.mxu0 0.0
      %781 = vmatpush.xpose.msra.mxu0 0.0
      %782 = vmatpush.xpose.msra.mxu0 0.0
      %783 = vmatpush.xpose.msra.mxu0 0.0
      %784 = vmatpush.xpose.msra.mxu0 0.0
      %785 = vmatpush.xpose.msra.mxu0 0.0
      %786 = vmatpush.xpose.msra.mxu0 0.0
      %787 = vmatpush.xpose.msra.mxu0 0.0
      %788 = vmatpush.xpose.msra.mxu0 %v772
      %789 = vmatpush.xpose.msra.mxu0 %v769
      %790 = vmatmul.f32.gmra.mxu0 %v766
      %v791 = vpop.f32.mrf.mxu0
      %v792 = vadd.f32 0.0, %v791
      %793 = vdwg.mxu0
      %vm794 = vcmask 130048
      %v795 = vsel %vm794, %v589, -inf
      %v796 = vrot.slane %v795, 4
      %v797 = vmax.f32 %v795, %v796
      %v798 = vrot.slane %v797, 2
      %v799 = vmax.f32 %v797, %v798
      %v800 = vrot.slane %v799, 1
      %v801 = vmax.f32 %v799, %v800
      %v802 = vsel %vm794, %v618, -inf
      %v803 = vrot.slane %v802, 4
      %v804 = vmax.f32 %v802, %v803
      %v805 = vrot.slane %v804, 2
      %v806 = vmax.f32 %v804, %v805
      %v807 = vrot.slane %v806, 1
      %v808 = vmax.f32 %v806, %v807
      %v809 = vsel %vm794, %v647, -inf
      %v810 = vrot.slane %v809, 4
      %v811 = vmax.f32 %v809, %v810
      %v812 = vrot.slane %v811, 2
      %v813 = vmax.f32 %v811, %v812
      %v814 = vrot.slane %v813, 1
      %v815 = vmax.f32 %v813, %v814
      %v816 = vsel %vm794, %v676, -inf
      %v817 = vrot.slane %v816, 4
      %v818 = vmax.f32 %v816, %v817
      %v819 = vrot.slane %v818, 2
      %v820 = vmax.f32 %v818, %v819
      %v821 = vrot.slane %v820, 1
      %v822 = vmax.f32 %v820, %v821
      %v823 = vsel %vm794, %v705, -inf
      %v824 = vrot.slane %v823, 4
      %v825 = vmax.f32 %v823, %v824
      %v826 = vrot.slane %v825, 2
      %v827 = vmax.f32 %v825, %v826
      %v828 = vrot.slane %v827, 1
      %v829 = vmax.f32 %v827, %v828
      %v830 = vsel %vm794, %v734, -inf
      %v831 = vrot.slane %v830, 4
      %v832 = vmax.f32 %v830, %v831
      %v833 = vrot.slane %v832, 2
      %v834 = vmax.f32 %v832, %v833
      %v835 = vrot.slane %v834, 1
      %v836 = vmax.f32 %v834, %v835
      %v837 = vsel %vm794, %v763, -inf
      %v838 = vrot.slane %v837, 4
      %v839 = vmax.f32 %v837, %v838
      %v840 = vrot.slane %v839, 2
      %v841 = vmax.f32 %v839, %v840
      %v842 = vrot.slane %v841, 1
      %v843 = vmax.f32 %v841, %v842
      %v844 = vsel %vm794, %v792, -inf
      %v845 = vrot.slane %v844, 4
      %v846 = vmax.f32 %v844, %v845
      %v847 = vrot.slane %v846, 2
      %v848 = vmax.f32 %v846, %v847
      %v849 = vrot.slane %v848, 1
      %v850 = vmax.f32 %v848, %v849
      %v851 = vsub.f32 %v589, %v801
      %v852 = vsub.f32 %v618, %v808
      %v853 = vsub.f32 %v647, %v815
      %v854 = vsub.f32 %v676, %v822
      %v855 = vsub.f32 %v705, %v829
      %v856 = vsub.f32 %v734, %v836
      %v857 = vsub.f32 %v763, %v843
      %v858 = vsub.f32 %v792, %v850
      %v859 = vmul.f32 %v851, 1.442695
      %v860 = vpow.pop %v859
      %v861 = vmul.f32 %v852, 1.442695
      %v862 = vpow.pop %v861
      %v863 = vmul.f32 %v853, 1.442695
      %v864 = vpow.pop %v863
      %v865 = vmul.f32 %v854, 1.442695
      %v866 = vpow.pop %v865
      %v867 = vmul.f32 %v855, 1.442695
      %v868 = vpow.pop %v867
      %v869 = vmul.f32 %v856, 1.442695
      %v870 = vpow.pop %v869
      %v871 = vmul.f32 %v857, 1.442695
      %v872 = vpow.pop %v871
      %v873 = vmul.f32 %v858, 1.442695
      %v874 = vpow.pop %v873
      %v875 = vsel %vm794, %v860, 0.0
      %v876 = vrot.slane %v875, 4
      %v877 = vadd.f32 %v875, %v876
      %v878 = vrot.slane %v877, 2
      %v879 = vadd.f32 %v877, %v878
      %v880 = vrot.slane %v879, 1
      %v881 = vadd.f32 %v879, %v880
      %v882 = vsel %vm794, %v862, 0.0
      %v883 = vrot.slane %v882, 4
      %v884 = vadd.f32 %v882, %v883
      %v885 = vrot.slane %v884, 2
      %v886 = vadd.f32 %v884, %v885
      %v887 = vrot.slane %v886, 1
      %v888 = vadd.f32 %v886, %v887
      %v889 = vsel %vm794, %v864, 0.0
      %v890 = vrot.slane %v889, 4
      %v891 = vadd.f32 %v889, %v890
      %v892 = vrot.slane %v891, 2
      %v893 = vadd.f32 %v891, %v892
      %v894 = vrot.slane %v893, 1
      %v895 = vadd.f32 %v893, %v894
      %v896 = vsel %vm794, %v866, 0.0
      %v897 = vrot.slane %v896, 4
      %v898 = vadd.f32 %v896, %v897
      %v899 = vrot.slane %v898, 2
      %v900 = vadd.f32 %v898, %v899
      %v901 = vrot.slane %v900, 1
      %v902 = vadd.f32 %v900, %v901
      %v903 = vsel %vm794, %v868, 0.0
      %v904 = vrot.slane %v903, 4
      %v905 = vadd.f32 %v903, %v904
      %v906 = vrot.slane %v905, 2
      %v907 = vadd.f32 %v905, %v906
      %v908 = vrot.slane %v907, 1
      %v909 = vadd.f32 %v907, %v908
      %v910 = vsel %vm794, %v870, 0.0
      %v911 = vrot.slane %v910, 4
      %v912 = vadd.f32 %v910, %v911
      %v913 = vrot.slane %v912, 2
      %v914 = vadd.f32 %v912, %v913
      %v915 = vrot.slane %v914, 1
      %v916 = vadd.f32 %v914, %v915
      %v917 = vsel %vm794, %v872, 0.0
      %v918 = vrot.slane %v917, 4
      %v919 = vadd.f32 %v917, %v918
      %v920 = vrot.slane %v919, 2
      %v921 = vadd.f32 %v919, %v920
      %v922 = vrot.slane %v921, 1
      %v923 = vadd.f32 %v921, %v922
      %v924 = vsel %vm794, %v874, 0.0
      %v925 = vrot.slane %v924, 4
      %v926 = vadd.f32 %v924, %v925
      %v927 = vrot.slane %v926, 2
      %v928 = vadd.f32 %v926, %v927
      %v929 = vrot.slane %v928, 1
      %v930 = vadd.f32 %v928, %v929
      %v931 = vrcp.pop %v881
      %v932 = vrcp.pop %v888
      %v933 = vrcp.pop %v895
      %v934 = vrcp.pop %v902
      %v935 = vrcp.pop %v909
      %v936 = vrcp.pop %v916
      %v937 = vrcp.pop %v923
      %v938 = vrcp.pop %v930
      %v939 = vmul.f32 %v860, %v931
      %v940 = vmul.f32 %v862, %v932
      %v941 = vmul.f32 %v864, %v933
      %v942 = vmul.f32 %v866, %v934
      %v943 = vmul.f32 %v868, %v935
      %v944 = vmul.f32 %v870, %v936
      %v945 = vmul.f32 %v872, %v937
      %v946 = vmul.f32 %v874, %v938
      %947 = vmax.xlane.f32.xlu0 %v795
      %v948 = vpop.xlane.xlu0 %947
      %949 = vmax.xlane.f32.xlu0 %v802
      %v950 = vpop.xlane.xlu0 %949
      %951 = vmax.xlane.f32.xlu0 %v809
      %v952 = vpop.xlane.xlu0 %951
      %953 = vmax.xlane.f32.xlu0 %v816
      %v954 = vpop.xlane.xlu0 %953
      %955 = vmax.xlane.f32.xlu0 %v823
      %v956 = vpop.xlane.xlu0 %955
      %957 = vmax.xlane.f32.xlu0 %v830
      %v958 = vpop.xlane.xlu0 %957
      %959 = vmax.xlane.f32.xlu0 %v837
      %v960 = vpop.xlane.xlu0 %959
      %961 = vmax.xlane.f32.xlu0 %v844
      %v962 = vpop.xlane.xlu0 %961
      %v963 = vsub.f32 %v589, %v948
      %v964 = vsub.f32 %v618, %v950
      %v965 = vsub.f32 %v647, %v952
      %v966 = vsub.f32 %v676, %v954
      %v967 = vsub.f32 %v705, %v956
      %v968 = vsub.f32 %v734, %v958
      %v969 = vsub.f32 %v763, %v960
      %v970 = vsub.f32 %v792, %v962
      %v971 = vmul.f32 %v963, 1.442695
      %v972 = vpow.pop %v971
      %v973 = vmul.f32 %v964, 1.442695
      %v974 = vpow.pop %v973
      %v975 = vmul.f32 %v965, 1.442695
      %v976 = vpow.pop %v975
      %v977 = vmul.f32 %v966, 1.442695
      %v978 = vpow.pop %v977
      %v979 = vmul.f32 %v967, 1.442695
      %v980 = vpow.pop %v979
      %v981 = vmul.f32 %v968, 1.442695
      %v982 = vpow.pop %v981
      %v983 = vmul.f32 %v969, 1.442695
      %v984 = vpow.pop %v983
      %v985 = vmul.f32 %v970, 1.442695
      %v986 = vpow.pop %v985
      %v987 = vsel %vm794, %v972, 0.0
      %988 = vadd.xlane.f32.xlu0 %v987
      %v989 = vpop.xlane.xlu0 %988
      %v990 = vsel %vm794, %v974, 0.0
      %991 = vadd.xlane.f32.xlu0 %v990
      %v992 = vpop.xlane.xlu0 %991
      %v993 = vsel %vm794, %v976, 0.0
      %994 = vadd.xlane.f32.xlu0 %v993
      %v995 = vpop.xlane.xlu0 %994
      %v996 = vsel %vm794, %v978, 0.0
      %997 = vadd.xlane.f32.xlu0 %v996
      %v998 = vpop.xlane.xlu0 %997
      %v999 = vsel %vm794, %v980, 0.0
      %1000 = vadd.xlane.f32.xlu0 %v999
      %v1001 = vpop.xlane.xlu0 %1000
      %v1002 = vsel %vm794, %v982, 0.0
      %1003 = vadd.xlane.f32.xlu0 %v1002
      %v1004 = vpop.xlane.xlu0 %1003
      %v1005 = vsel %vm794, %v984, 0.0
      %1006 = vadd.xlane.f32.xlu0 %v1005
      %v1007 = vpop.xlane.xlu0 %1006
      %v1008 = vsel %vm794, %v986, 0.0
      %1009 = vadd.xlane.f32.xlu0 %v1008
      %v1010 = vpop.xlane.xlu0 %1009
      %v1011 = vrcp.pop %v989
      %v1012 = vrcp.pop %v992
      %v1013 = vrcp.pop %v995
      %v1014 = vrcp.pop %v998
      %v1015 = vrcp.pop %v1001
      %v1016 = vrcp.pop %v1004
      %v1017 = vrcp.pop %v1007
      %v1018 = vrcp.pop %v1010
      %v1019 = vmul.f32 %v972, %v1011
      %v1020 = vmul.f32 %v974, %v1012
      %v1021 = vmul.f32 %v976, %v1013
      %v1022 = vmul.f32 %v978, %v1014
      %v1023 = vmul.f32 %v980, %v1015
      %v1024 = vmul.f32 %v982, %v1016
      %v1025 = vmul.f32 %v984, %v1017
      %v1026 = vmul.f32 %v986, %v1018
      %v1028 = vsel %vm794, %v939, 0
      %1030 = vmatpush.msra.mxu0 0.0
      %1031 = vmatpush.msra.mxu0 0.0
      %1032 = vmatpush.msra.mxu0 0.0
      %1033 = vmatpush.msra.mxu0 0.0
      %1034 = vmatpush.msra.mxu0 0.0
      %1035 = vmatpush.msra.mxu0 0.0
      %1036 = vmatpush.msra.mxu0 0.0
      %1037 = vmatpush.msra.mxu0 0.0
      %1038 = vmatpush.msra.mxu0 0.0
      %1039 = vmatpush.msra.mxu0 0.0
      %1040 = vmatpush.msra.mxu0 0.0
      %1041 = vmatpush.msra.mxu0 0.0
      %1042 = vmatpush.msra.mxu0 0.0
      %1043 = vmatpush.msra.mxu0 0.0
      %1044 = vmatpush.msra.mxu0 %v518
      %1045 = vmatpush.msra.mxu0 %v515
      %1046 = vmatmul.f32.gmra.mxu0 %v1028
      %v1047 = vpop.f32.mrf.mxu0
      %v1048 = vadd.f32 0.0, %v1047
      %1049 = vdwg.mxu0
      %v1051 = vsel %vm794, %v940, 0
      %1053 = vmatpush.msra.mxu0 0.0
      %1054 = vmatpush.msra.mxu0 0.0
      %1055 = vmatpush.msra.mxu0 0.0
      %1056 = vmatpush.msra.mxu0 0.0
      %1057 = vmatpush.msra.mxu0 0.0
      %1058 = vmatpush.msra.mxu0 0.0
      %1059 = vmatpush.msra.mxu0 0.0
      %1060 = vmatpush.msra.mxu0 0.0
      %1061 = vmatpush.msra.mxu0 0.0
      %1062 = vmatpush.msra.mxu0 0.0
      %1063 = vmatpush.msra.mxu0 0.0
      %1064 = vmatpush.msra.mxu0 0.0
      %1065 = vmatpush.msra.mxu0 0.0
      %1066 = vmatpush.msra.mxu0 0.0
      %1067 = vmatpush.msra.mxu0 %v524
      %1068 = vmatpush.msra.mxu0 %v521
      %1069 = vmatmul.f32.gmra.mxu0 %v1051
      %v1070 = vpop.f32.mrf.mxu0
      %v1071 = vadd.f32 0.0, %v1070
      %1072 = vdwg.mxu0
      %v1074 = vsel %vm794, %v941, 0
      %1076 = vmatpush.msra.mxu0 0.0
      %1077 = vmatpush.msra.mxu0 0.0
      %1078 = vmatpush.msra.mxu0 0.0
      %1079 = vmatpush.msra.mxu0 0.0
      %1080 = vmatpush.msra.mxu0 0.0
      %1081 = vmatpush.msra.mxu0 0.0
      %1082 = vmatpush.msra.mxu0 0.0
      %1083 = vmatpush.msra.mxu0 0.0
      %1084 = vmatpush.msra.mxu0 0.0
      %1085 = vmatpush.msra.mxu0 0.0
      %1086 = vmatpush.msra.mxu0 0.0
      %1087 = vmatpush.msra.mxu0 0.0
      %1088 = vmatpush.msra.mxu0 0.0
      %1089 = vmatpush.msra.mxu0 0.0
      %1090 = vmatpush.msra.mxu0 %v530
      %1091 = vmatpush.msra.mxu0 %v527
      %1092 = vmatmul.f32.gmra.mxu0 %v1074
      %v1093 = vpop.f32.mrf.mxu0
      %v1094 = vadd.f32 0.0, %v1093
      %1095 = vdwg.mxu0
      %v1097 = vsel %vm794, %v942, 0
      %1099 = vmatpush.msra.mxu0 0.0
      %1100 = vmatpush.msra.mxu0 0.0
      %1101 = vmatpush.msra.mxu0 0.0
      %1102 = vmatpush.msra.mxu0 0.0
      %1103 = vmatpush.msra.mxu0 0.0
      %1104 = vmatpush.msra.mxu0 0.0
      %1105 = vmatpush.msra.mxu0 0.0
      %1106 = vmatpush.msra.mxu0 0.0
      %1107 = vmatpush.msra.mxu0 0.0
      %1108 = vmatpush.msra.mxu0 0.0
      %1109 = vmatpush.msra.mxu0 0.0
      %1110 = vmatpush.msra.mxu0 0.0
      %1111 = vmatpush.msra.mxu0 0.0
      %1112 = vmatpush.msra.mxu0 0.0
      %1113 = vmatpush.msra.mxu0 %v536
      %1114 = vmatpush.msra.mxu0 %v533
      %1115 = vmatmul.f32.gmra.mxu0 %v1097
      %v1116 = vpop.f32.mrf.mxu0
      %v1117 = vadd.f32 0.0, %v1116
      %1118 = vdwg.mxu0
      %v1120 = vsel %vm794, %v943, 0
      %1122 = vmatpush.msra.mxu0 0.0
      %1123 = vmatpush.msra.mxu0 0.0
      %1124 = vmatpush.msra.mxu0 0.0
      %1125 = vmatpush.msra.mxu0 0.0
      %1126 = vmatpush.msra.mxu0 0.0
      %1127 = vmatpush.msra.mxu0 0.0
      %1128 = vmatpush.msra.mxu0 0.0
      %1129 = vmatpush.msra.mxu0 0.0
      %1130 = vmatpush.msra.mxu0 0.0
      %1131 = vmatpush.msra.mxu0 0.0
      %1132 = vmatpush.msra.mxu0 0.0
      %1133 = vmatpush.msra.mxu0 0.0
      %1134 = vmatpush.msra.mxu0 0.0
      %1135 = vmatpush.msra.mxu0 0.0
      %1136 = vmatpush.msra.mxu0 %v542
      %1137 = vmatpush.msra.mxu0 %v539
      %1138 = vmatmul.f32.gmra.mxu0 %v1120
      %v1139 = vpop.f32.mrf.mxu0
      %v1140 = vadd.f32 0.0, %v1139
      %1141 = vdwg.mxu0
      %v1143 = vsel %vm794, %v944, 0
      %1145 = vmatpush.msra.mxu0 0.0
      %1146 = vmatpush.msra.mxu0 0.0
      %1147 = vmatpush.msra.mxu0 0.0
      %1148 = vmatpush.msra.mxu0 0.0
      %1149 = vmatpush.msra.mxu0 0.0
      %1150 = vmatpush.msra.mxu0 0.0
      %1151 = vmatpush.msra.mxu0 0.0
      %1152 = vmatpush.msra.mxu0 0.0
      %1153 = vmatpush.msra.mxu0 0.0
      %1154 = vmatpush.msra.mxu0 0.0
      %1155 = vmatpush.msra.mxu0 0.0
      %1156 = vmatpush.msra.mxu0 0.0
      %1157 = vmatpush.msra.mxu0 0.0
      %1158 = vmatpush.msra.mxu0 0.0
      %1159 = vmatpush.msra.mxu0 %v548
      %1160 = vmatpush.msra.mxu0 %v545
      %1161 = vmatmul.f32.gmra.mxu0 %v1143
      %v1162 = vpop.f32.mrf.mxu0
      %v1163 = vadd.f32 0.0, %v1162
      %1164 = vdwg.mxu0
      %v1166 = vsel %vm794, %v945, 0
      %1168 = vmatpush.msra.mxu0 0.0
      %1169 = vmatpush.msra.mxu0 0.0
      %1170 = vmatpush.msra.mxu0 0.0
      %1171 = vmatpush.msra.mxu0 0.0
      %1172 = vmatpush.msra.mxu0 0.0
      %1173 = vmatpush.msra.mxu0 0.0
      %1174 = vmatpush.msra.mxu0 0.0
      %1175 = vmatpush.msra.mxu0 0.0
      %1176 = vmatpush.msra.mxu0 0.0
      %1177 = vmatpush.msra.mxu0 0.0
      %1178 = vmatpush.msra.mxu0 0.0
      %1179 = vmatpush.msra.mxu0 0.0
      %1180 = vmatpush.msra.mxu0 0.0
      %1181 = vmatpush.msra.mxu0 0.0
      %1182 = vmatpush.msra.mxu0 %v554
      %1183 = vmatpush.msra.mxu0 %v551
      %1184 = vmatmul.f32.gmra.mxu0 %v1166
      %v1185 = vpop.f32.mrf.mxu0
      %v1186 = vadd.f32 0.0, %v1185
      %1187 = vdwg.mxu0
      %v1189 = vsel %vm794, %v946, 0
      %1191 = vmatpush.msra.mxu0 0.0
      %1192 = vmatpush.msra.mxu0 0.0
      %1193 = vmatpush.msra.mxu0 0.0
      %1194 = vmatpush.msra.mxu0 0.0
      %1195 = vmatpush.msra.mxu0 0.0
      %1196 = vmatpush.msra.mxu0 0.0
      %1197 = vmatpush.msra.mxu0 0.0
      %1198 = vmatpush.msra.mxu0 0.0
      %1199 = vmatpush.msra.mxu0 0.0
      %1200 = vmatpush.msra.mxu0 0.0
      %1201 = vmatpush.msra.mxu0 0.0
      %1202 = vmatpush.msra.mxu0 0.0
      %1203 = vmatpush.msra.mxu0 0.0
      %1204 = vmatpush.msra.mxu0 0.0
      %1205 = vmatpush.msra.mxu0 %v560
      %1206 = vmatpush.msra.mxu0 %v557
      %1207 = vmatmul.f32.gmra.mxu0 %v1189
      %v1208 = vpop.f32.mrf.mxu0
      %v1209 = vadd.f32 0.0, %v1208
      %1210 = vdwg.mxu0
      %v1212 = vsel %vm794, %v1019, 0
      %v1215 = vsel %vm794, %v1020, 0
      %v1218 = vsel %vm794, %v1021, 0
      %v1221 = vsel %vm794, %v1022, 0
      %v1224 = vsel %vm794, %v1023, 0
      %v1227 = vsel %vm794, %v1024, 0
      %v1230 = vsel %vm794, %v1025, 0
      %v1233 = vsel %vm794, %v1026, 0
      %1235 = vmatpush.msra.mxu0 0.0
      %1236 = vmatpush.msra.mxu0 0.0
      %1237 = vmatpush.msra.mxu0 0.0
      %1238 = vmatpush.msra.mxu0 0.0
      %1239 = vmatpush.msra.mxu0 0.0
      %1240 = vmatpush.msra.mxu0 0.0
      %1241 = vmatpush.msra.mxu0 0.0
      %1242 = vmatpush.msra.mxu0 0.0
      %1243 = vmatpush.msra.mxu0 0.0
      %1244 = vmatpush.msra.mxu0 0.0
      %1245 = vmatpush.msra.mxu0 0.0
      %1246 = vmatpush.msra.mxu0 0.0
      %1247 = vmatpush.msra.mxu0 0.0
      %1248 = vmatpush.msra.mxu0 0.0
      %1249 = vmatpush.msra.mxu0 %v367
      %1250 = vmatpush.msra.mxu0 %v366
      %1251 = vmatmul.f32.gmra.mxu0 %v1212
      %v1252 = vpop.f32.mrf.mxu0
      %v1253 = vadd.f32 0.0, %v1252
      %1254 = vmatmul.f32.gmra.mxu0 %v1215
      %v1255 = vpop.f32.mrf.mxu0
      %v1256 = vadd.f32 0.0, %v1255
      %1257 = vmatmul.f32.gmra.mxu0 %v1218
      %v1258 = vpop.f32.mrf.mxu0
      %v1259 = vadd.f32 0.0, %v1258
      %1260 = vmatmul.f32.gmra.mxu0 %v1221
      %v1261 = vpop.f32.mrf.mxu0
      %v1262 = vadd.f32 0.0, %v1261
      %1263 = vmatmul.f32.gmra.mxu0 %v1224
      %v1264 = vpop.f32.mrf.mxu0
      %v1265 = vadd.f32 0.0, %v1264
      %1266 = vmatmul.f32.gmra.mxu0 %v1227
      %v1267 = vpop.f32.mrf.mxu0
      %v1268 = vadd.f32 0.0, %v1267
      %1269 = vmatmul.f32.gmra.mxu0 %v1230
      %v1270 = vpop.f32.mrf.mxu0
      %v1271 = vadd.f32 0.0, %v1270
      %1272 = vmatmul.f32.gmra.mxu0 %v1233
      %v1273 = vpop.f32.mrf.mxu0
      %v1274 = vadd.f32 0.0, %v1273
      %1275 = vdwg.mxu0
      %1276 = vxpose.xlu0.b32.start [1/16] %v1253, 128
      %1277 = vxpose.xlu0.b32.cont [2/16] 0.0, 128
      %1278 = vxpose.xlu0.b32.cont [3/16] 0.0, 128
      %1279 = vxpose.xlu0.b32.cont [4/16] 0.0, 128
      %1280 = vxpose.xlu0.b32.cont [5/16] 0.0, 128
      %1281 = vxpose.xlu0.b32.cont [6/16] 0.0, 128
      %1282 = vxpose.xlu0.b32.cont [7/16] 0.0, 128
      %1283 = vxpose.xlu0.b32.cont [8/16] 0.0, 128
      %1284 = vxpose.xlu0.b32.cont [9/16] 0.0, 128
      %1285 = vxpose.xlu0.b32.cont [10/16] 0.0, 128
      %1286 = vxpose.xlu0.b32.cont [11/16] 0.0, 128
      %1287 = vxpose.xlu0.b32.cont [12/16] 0.0, 128
      %1288 = vxpose.xlu0.b32.cont [13/16] 0.0, 128
      %1289 = vxpose.xlu0.b32.cont [14/16] 0.0, 128
      %1290 = vxpose.xlu0.b32.cont [15/16] 0.0, 128
      %1291 = vxpose.xlu0.b32.end [16/16] 0.0, 128
      %v1292 = vpop.trf.xlu0
      %v1293 = vpop.trf.xlu0
      %v1294 = vpop.trf.xlu0
      %v1295 = vpop.trf.xlu0
      %v1296 = vpop.trf.xlu0
      %v1297 = vpop.trf.xlu0
      %v1298 = vpop.trf.xlu0
      %v1299 = vpop.trf.xlu0
      %v1300 = vpop.trf.xlu0
      %v1301 = vpop.trf.xlu0
      %v1302 = vpop.trf.xlu0
      %v1303 = vpop.trf.xlu0
      %v1304 = vpop.trf.xlu0
      %v1305 = vpop.trf.xlu0
      %v1306 = vpop.trf.xlu0
      %v1307 = vpop.trf.xlu0
      %1308 = vxpose.xlu0.b32.start [1/16] %v1256, 128
      %1309 = vxpose.xlu0.b32.cont [2/16] 0.0, 128
      %1310 = vxpose.xlu0.b32.cont [3/16] 0.0, 128
      %1311 = vxpose.xlu0.b32.cont [4/16] 0.0, 128
      %1312 = vxpose.xlu0.b32.cont [5/16] 0.0, 128
      %1313 = vxpose.xlu0.b32.cont [6/16] 0.0, 128
      %1314 = vxpose.xlu0.b32.cont [7/16] 0.0, 128
      %1315 = vxpose.xlu0.b32.cont [8/16] 0.0, 128
      %1316 = vxpose.xlu0.b32.cont [9/16] 0.0, 128
      %1317 = vxpose.xlu0.b32.cont [10/16] 0.0, 128
      %1318 = vxpose.xlu0.b32.cont [11/16] 0.0, 128
      %1319 = vxpose.xlu0.b32.cont [12/16] 0.0, 128
      %1320 = vxpose.xlu0.b32.cont [13/16] 0.0, 128
      %1321 = vxpose.xlu0.b32.cont [14/16] 0.0, 128
      %1322 = vxpose.xlu0.b32.cont [15/16] 0.0, 128
      %1323 = vxpose.xlu0.b32.end [16/16] 0.0, 128
      %v1324 = vpop.trf.xlu0
      %v1325 = vpop.trf.xlu0
      %v1326 = vpop.trf.xlu0
      %v1327 = vpop.trf.xlu0
      %v1328 = vpop.trf.xlu0
      %v1329 = vpop.trf.xlu0
      %v1330 = vpop.trf.xlu0
      %v1331 = vpop.trf.xlu0
      %v1332 = vpop.trf.xlu0
      %v1333 = vpop.trf.xlu0
      %v1334 = vpop.trf.xlu0
      %v1335 = vpop.trf.xlu0
      %v1336 = vpop.trf.xlu0
      %v1337 = vpop.trf.xlu0
      %v1338 = vpop.trf.xlu0
      %v1339 = vpop.trf.xlu0
      %1340 = vxpose.xlu0.b32.start [1/16] %v1259, 128
      %1341 = vxpose.xlu0.b32.cont [2/16] 0.0, 128
      %1342 = vxpose.xlu0.b32.cont [3/16] 0.0, 128
      %1343 = vxpose.xlu0.b32.cont [4/16] 0.0, 128
      %1344 = vxpose.xlu0.b32.cont [5/16] 0.0, 128
      %1345 = vxpose.xlu0.b32.cont [6/16] 0.0, 128
      %1346 = vxpose.xlu0.b32.cont [7/16] 0.0, 128
      %1347 = vxpose.xlu0.b32.cont [8/16] 0.0, 128
      %1348 = vxpose.xlu0.b32.cont [9/16] 0.0, 128
      %1349 = vxpose.xlu0.b32.cont [10/16] 0.0, 128
      %1350 = vxpose.xlu0.b32.cont [11/16] 0.0, 128
      %1351 = vxpose.xlu0.b32.cont [12/16] 0.0, 128
      %1352 = vxpose.xlu0.b32.cont [13/16] 0.0, 128
      %1353 = vxpose.xlu0.b32.cont [14/16] 0.0, 128
      %1354 = vxpose.xlu0.b32.cont [15/16] 0.0, 128
      %1355 = vxpose.xlu0.b32.end [16/16] 0.0, 128
      %v1356 = vpop.trf.xlu0
      %v1357 = vpop.trf.xlu0
      %v1358 = vpop.trf.xlu0
      %v1359 = vpop.trf.xlu0
      %v1360 = vpop.trf.xlu0
      %v1361 = vpop.trf.xlu0
      %v1362 = vpop.trf.xlu0
      %v1363 = vpop.trf.xlu0
      %v1364 = vpop.trf.xlu0
      %v1365 = vpop.trf.xlu0
      %v1366 = vpop.trf.xlu0
      %v1367 = vpop.trf.xlu0
      %v1368 = vpop.trf.xlu0
      %v1369 = vpop.trf.xlu0
      %v1370 = vpop.trf.xlu0
      %v1371 = vpop.trf.xlu0
      %1372 = vxpose.xlu0.b32.start [1/16] %v1262, 128
      %1373 = vxpose.xlu0.b32.cont [2/16] 0.0, 128
      %1374 = vxpose.xlu0.b32.cont [3/16] 0.0, 128
      %1375 = vxpose.xlu0.b32.cont [4/16] 0.0, 128
      %1376 = vxpose.xlu0.b32.cont [5/16] 0.0, 128
      %1377 = vxpose.xlu0.b32.cont [6/16] 0.0, 128
      %1378 = vxpose.xlu0.b32.cont [7/16] 0.0, 128
      %1379 = vxpose.xlu0.b32.cont [8/16] 0.0, 128
      %1380 = vxpose.xlu0.b32.cont [9/16] 0.0, 128
      %1381 = vxpose.xlu0.b32.cont [10/16] 0.0, 128
      %1382 = vxpose.xlu0.b32.cont [11/16] 0.0, 128
      %1383 = vxpose.xlu0.b32.cont [12/16] 0.0, 128
      %1384 = vxpose.xlu0.b32.cont [13/16] 0.0, 128
      %1385 = vxpose.xlu0.b32.cont [14/16] 0.0, 128
      %1386 = vxpose.xlu0.b32.cont [15/16] 0.0, 128
      %1387 = vxpose.xlu0.b32.end [16/16] 0.0, 128
      %v1388 = vpop.trf.xlu0
      %v1389 = vpop.trf.xlu0
      %v1390 = vpop.trf.xlu0
      %v1391 = vpop.trf.xlu0
      %v1392 = vpop.trf.xlu0
      %v1393 = vpop.trf.xlu0
      %v1394 = vpop.trf.xlu0
      %v1395 = vpop.trf.xlu0
      %v1396 = vpop.trf.xlu0
      %v1397 = vpop.trf.xlu0
      %v1398 = vpop.trf.xlu0
      %v1399 = vpop.trf.xlu0
      %v1400 = vpop.trf.xlu0
      %v1401 = vpop.trf.xlu0
      %v1402 = vpop.trf.xlu0
      %v1403 = vpop.trf.xlu0
      %1404 = vxpose.xlu0.b32.start [1/16] %v1265, 128
      %1405 = vxpose.xlu0.b32.cont [2/16] 0.0, 128
      %1406 = vxpose.xlu0.b32.cont [3/16] 0.0, 128
      %1407 = vxpose.xlu0.b32.cont [4/16] 0.0, 128
      %1408 = vxpose.xlu0.b32.cont [5/16] 0.0, 128
      %1409 = vxpose.xlu0.b32.cont [6/16] 0.0, 128
      %1410 = vxpose.xlu0.b32.cont [7/16] 0.0, 128
      %1411 = vxpose.xlu0.b32.cont [8/16] 0.0, 128
      %1412 = vxpose.xlu0.b32.cont [9/16] 0.0, 128
      %1413 = vxpose.xlu0.b32.cont [10/16] 0.0, 128
      %1414 = vxpose.xlu0.b32.cont [11/16] 0.0, 128
      %1415 = vxpose.xlu0.b32.cont [12/16] 0.0, 128
      %1416 = vxpose.xlu0.b32.cont [13/16] 0.0, 128
      %1417 = vxpose.xlu0.b32.cont [14/16] 0.0, 128
      %1418 = vxpose.xlu0.b32.cont [15/16] 0.0, 128
      %1419 = vxpose.xlu0.b32.end [16/16] 0.0, 128
      %v1420 = vpop.trf.xlu0
      %v1421 = vpop.trf.xlu0
      %v1422 = vpop.trf.xlu0
      %v1423 = vpop.trf.xlu0
      %v1424 = vpop.trf.xlu0
      %v1425 = vpop.trf.xlu0
      %v1426 = vpop.trf.xlu0
      %v1427 = vpop.trf.xlu0
      %v1428 = vpop.trf.xlu0
      %v1429 = vpop.trf.xlu0
      %v1430 = vpop.trf.xlu0
      %v1431 = vpop.trf.xlu0
      %v1432 = vpop.trf.xlu0
      %v1433 = vpop.trf.xlu0
      %v1434 = vpop.trf.xlu0
      %v1435 = vpop.trf.xlu0
      %1436 = vxpose.xlu0.b32.start [1/16] %v1268, 128
      %1437 = vxpose.xlu0.b32.cont [2/16] 0.0, 128
      %1438 = vxpose.xlu0.b32.cont [3/16] 0.0, 128
      %1439 = vxpose.xlu0.b32.cont [4/16] 0.0, 128
      %1440 = vxpose.xlu0.b32.cont [5/16] 0.0, 128
      %1441 = vxpose.xlu0.b32.cont [6/16] 0.0, 128
      %1442 = vxpose.xlu0.b32.cont [7/16] 0.0, 128
      %1443 = vxpose.xlu0.b32.cont [8/16] 0.0, 128
      %1444 = vxpose.xlu0.b32.cont [9/16] 0.0, 128
      %1445 = vxpose.xlu0.b32.cont [10/16] 0.0, 128
      %1446 = vxpose.xlu0.b32.cont [11/16] 0.0, 128
      %1447 = vxpose.xlu0.b32.cont [12/16] 0.0, 128
      %1448 = vxpose.xlu0.b32.cont [13/16] 0.0, 128
      %1449 = vxpose.xlu0.b32.cont [14/16] 0.0, 128
      %1450 = vxpose.xlu0.b32.cont [15/16] 0.0, 128
      %1451 = vxpose.xlu0.b32.end [16/16] 0.0, 128
      %v1452 = vpop.trf.xlu0
      %v1453 = vpop.trf.xlu0
      %v1454 = vpop.trf.xlu0
      %v1455 = vpop.trf.xlu0
      %v1456 = vpop.trf.xlu0
      %v1457 = vpop.trf.xlu0
      %v1458 = vpop.trf.xlu0
      %v1459 = vpop.trf.xlu0
      %v1460 = vpop.trf.xlu0
      %v1461 = vpop.trf.xlu0
      %v1462 = vpop.trf.xlu0
      %v1463 = vpop.trf.xlu0
      %v1464 = vpop.trf.xlu0
      %v1465 = vpop.trf.xlu0
      %v1466 = vpop.trf.xlu0
      %v1467 = vpop.trf.xlu0
      %1468 = vxpose.xlu0.b32.start [1/16] %v1271, 128
      %1469 = vxpose.xlu0.b32.cont [2/16] 0.0, 128
      %1470 = vxpose.xlu0.b32.cont [3/16] 0.0, 128
      %1471 = vxpose.xlu0.b32.cont [4/16] 0.0, 128
      %1472 = vxpose.xlu0.b32.cont [5/16] 0.0, 128
      %1473 = vxpose.xlu0.b32.cont [6/16] 0.0, 128
      %1474 = vxpose.xlu0.b32.cont [7/16] 0.0, 128
      %1475 = vxpose.xlu0.b32.cont [8/16] 0.0, 128
      %1476 = vxpose.xlu0.b32.cont [9/16] 0.0, 128
      %1477 = vxpose.xlu0.b32.cont [10/16] 0.0, 128
      %1478 = vxpose.xlu0.b32.cont [11/16] 0.0, 128
      %1479 = vxpose.xlu0.b32.cont [12/16] 0.0, 128
      %1480 = vxpose.xlu0.b32.cont [13/16] 0.0, 128
      %1481 = vxpose.xlu0.b32.cont [14/16] 0.0, 128
      %1482 = vxpose.xlu0.b32.cont [15/16] 0.0, 128
      %1483 = vxpose.xlu0.b32.end [16/16] 0.0, 128
      %v1484 = vpop.trf.xlu0
      %v1485 = vpop.trf.xlu0
      %v1486 = vpop.trf.xlu0
      %v1487 = vpop.trf.xlu0
      %v1488 = vpop.trf.xlu0
      %v1489 = vpop.trf.xlu0
      %v1490 = vpop.trf.xlu0
      %v1491 = vpop.trf.xlu0
      %v1492 = vpop.trf.xlu0
      %v1493 = vpop.trf.xlu0
      %v1494 = vpop.trf.xlu0
      %v1495 = vpop.trf.xlu0
      %v1496 = vpop.trf.xlu0
      %v1497 = vpop.trf.xlu0
      %v1498 = vpop.trf.xlu0
      %v1499 = vpop.trf.xlu0
      %1500 = vxpose.xlu0.b32.start [1/16] %v1274, 128
      %1501 = vxpose.xlu0.b32.cont [2/16] 0.0, 128
      %1502 = vxpose.xlu0.b32.cont [3/16] 0.0, 128
      %1503 = vxpose.xlu0.b32.cont [4/16] 0.0, 128
      %1504 = vxpose.xlu0.b32.cont [5/16] 0.0, 128
      %1505 = vxpose.xlu0.b32.cont [6/16] 0.0, 128
      %1506 = vxpose.xlu0.b32.cont [7/16] 0.0, 128
      %1507 = vxpose.xlu0.b32.cont [8/16] 0.0, 128
      %1508 = vxpose.xlu0.b32.cont [9/16] 0.0, 128
      %1509 = vxpose.xlu0.b32.cont [10/16] 0.0, 128
      %1510 = vxpose.xlu0.b32.cont [11/16] 0.0, 128
      %1511 = vxpose.xlu0.b32.cont [12/16] 0.0, 128
      %1512 = vxpose.xlu0.b32.cont [13/16] 0.0, 128
      %1513 = vxpose.xlu0.b32.cont [14/16] 0.0, 128
      %1514 = vxpose.xlu0.b32.cont [15/16] 0.0, 128
      %1515 = vxpose.xlu0.b32.end [16/16] 0.0, 128
      %v1516 = vpop.trf.xlu0
      %v1517 = vpop.trf.xlu0
      %v1518 = vpop.trf.xlu0
      %v1519 = vpop.trf.xlu0
      %v1520 = vpop.trf.xlu0
      %v1521 = vpop.trf.xlu0
      %v1522 = vpop.trf.xlu0
      %v1523 = vpop.trf.xlu0
      %v1524 = vpop.trf.xlu0
      %v1525 = vpop.trf.xlu0
      %v1526 = vpop.trf.xlu0
      %v1527 = vpop.trf.xlu0
      %v1528 = vpop.trf.xlu0
      %v1529 = vpop.trf.xlu0
      %v1530 = vpop.trf.xlu0
      %v1531 = vpop.trf.xlu0
      %1540 = vrot.lane.b32.xlu0 %v1048, 12
      %v1541 = vpop.permute.xlu0 %1540
      %1542 = vrot.lane.b32.xlu0 %v1071, 12
      %v1543 = vpop.permute.xlu0 %1542
      %1544 = vrot.lane.b32.xlu0 %v1094, 12
      %v1545 = vpop.permute.xlu0 %1544
      %1546 = vrot.lane.b32.xlu0 %v1117, 12
      %v1547 = vpop.permute.xlu0 %1546
      %1548 = vrot.lane.b32.xlu0 %v1140, 12
      %v1549 = vpop.permute.xlu0 %1548
      %1550 = vrot.lane.b32.xlu0 %v1163, 12
      %v1551 = vpop.permute.xlu0 %1550
      %1552 = vrot.lane.b32.xlu0 %v1186, 12
      %v1553 = vpop.permute.xlu0 %1552
      %1554 = vrot.lane.b32.xlu0 %v1209, 12
      %v1555 = vpop.permute.xlu0 %1554
      %v1564 = vsel %vm375, %v336, %v1541
      %v1565 = vsel %vm375, %v337, %v1543
      %v1566 = vsel %vm375, %v338, %v1545
      %v1567 = vsel %vm375, %v339, %v1547
      %v1568 = vsel %vm375, %v340, %v1549
      %v1569 = vsel %vm375, %v341, %v1551
      %v1570 = vsel %vm375, %v342, %v1553
      %v1571 = vsel %vm375, %v343, %v1555
      %1573 = vset.pattern.permute.xlu0 0
      %1574 = vperm.xlu0 %1573, %v370
      %v1575 = vpop.permute.xlu0 %1574
      %1578 = vset.pattern.permute.xlu0 0
      %1579 = vperm.xlu0 %1578, %v371
      %v1580 = vpop.permute.xlu0 %1579
      %vm1582 = vcmask 64512
      %v1584 = vsel %vm1582, %v1292, 0
      %v1587 = vsel %vm1582, %v1293, 0
      %1589 = vmatpush.msra.mxu0 0.0
      %1590 = vmatpush.msra.mxu0 0.0
      %1591 = vmatpush.msra.mxu0 0.0
      %1592 = vmatpush.msra.mxu0 0.0
      %1593 = vmatpush.msra.mxu0 0.0
      %1594 = vmatpush.msra.mxu0 0.0
      %1595 = vmatpush.msra.mxu0 0.0
      %1596 = vmatpush.msra.mxu0 0.0
      %1597 = vmatpush.msra.mxu0 0.0
      %1598 = vmatpush.msra.mxu0 0.0
      %1599 = vmatpush.msra.mxu0 0.0
      %1600 = vmatpush.msra.mxu0 0.0
      %1601 = vmatpush.msra.mxu0 0.0
      %1602 = vmatpush.msra.mxu0 0.0
      %1603 = vmatpush.msra.mxu0 0.0
      %1604 = vmatpush.msra.mxu0 %v1564
      %1605 = vmatmul.f32.gmra.mxu0 %v1584
      %v1606 = vpop.f32.mrf.mxu0
      %v1607 = vadd.f32 %v1575, %v1606
      %1608 = vmatmul.f32.gmra.mxu0 %v1587
      %v1609 = vpop.f32.mrf.mxu0
      %v1610 = vadd.f32 %v1580, %v1609
      %1611 = vdwg.mxu0
      %v1613 = vsel %vm1582, %v1324, 0
      %v1616 = vsel %vm1582, %v1325, 0
      %1618 = vmatpush.msra.mxu0 0.0
      %1619 = vmatpush.msra.mxu0 0.0
      %1620 = vmatpush.msra.mxu0 0.0
      %1621 = vmatpush.msra.mxu0 0.0
      %1622 = vmatpush.msra.mxu0 0.0
      %1623 = vmatpush.msra.mxu0 0.0
      %1624 = vmatpush.msra.mxu0 0.0
      %1625 = vmatpush.msra.mxu0 0.0
      %1626 = vmatpush.msra.mxu0 0.0
      %1627 = vmatpush.msra.mxu0 0.0
      %1628 = vmatpush.msra.mxu0 0.0
      %1629 = vmatpush.msra.mxu0 0.0
      %1630 = vmatpush.msra.mxu0 0.0
      %1631 = vmatpush.msra.mxu0 0.0
      %1632 = vmatpush.msra.mxu0 0.0
      %1633 = vmatpush.msra.mxu0 %v1565
      %1634 = vmatmul.f32.gmra.mxu0 %v1613
      %v1635 = vpop.f32.mrf.mxu0
      %v1636 = vadd.f32 %v1575, %v1635
      %1637 = vmatmul.f32.gmra.mxu0 %v1616
      %v1638 = vpop.f32.mrf.mxu0
      %v1639 = vadd.f32 %v1580, %v1638
      %1640 = vdwg.mxu0
      %v1642 = vsel %vm1582, %v1356, 0
      %v1645 = vsel %vm1582, %v1357, 0
      %1647 = vmatpush.msra.mxu0 0.0
      %1648 = vmatpush.msra.mxu0 0.0
      %1649 = vmatpush.msra.mxu0 0.0
      %1650 = vmatpush.msra.mxu0 0.0
      %1651 = vmatpush.msra.mxu0 0.0
      %1652 = vmatpush.msra.mxu0 0.0
      %1653 = vmatpush.msra.mxu0 0.0
      %1654 = vmatpush.msra.mxu0 0.0
      %1655 = vmatpush.msra.mxu0 0.0
      %1656 = vmatpush.msra.mxu0 0.0
      %1657 = vmatpush.msra.mxu0 0.0
      %1658 = vmatpush.msra.mxu0 0.0
      %1659 = vmatpush.msra.mxu0 0.0
      %1660 = vmatpush.msra.mxu0 0.0
      %1661 = vmatpush.msra.mxu0 0.0
      %1662 = vmatpush.msra.mxu0 %v1566
      %1663 = vmatmul.f32.gmra.mxu0 %v1642
      %v1664 = vpop.f32.mrf.mxu0
      %v1665 = vadd.f32 %v1575, %v1664
      %1666 = vmatmul.f32.gmra.mxu0 %v1645
      %v1667 = vpop.f32.mrf.mxu0
      %v1668 = vadd.f32 %v1580, %v1667
      %1669 = vdwg.mxu0
      %v1671 = vsel %vm1582, %v1388, 0
      %v1674 = vsel %vm1582, %v1389, 0
      %1676 = vmatpush.msra.mxu0 0.0
      %1677 = vmatpush.msra.mxu0 0.0
      %1678 = vmatpush.msra.mxu0 0.0
      %1679 = vmatpush.msra.mxu0 0.0
      %1680 = vmatpush.msra.mxu0 0.0
      %1681 = vmatpush.msra.mxu0 0.0
      %1682 = vmatpush.msra.mxu0 0.0
      %1683 = vmatpush.msra.mxu0 0.0
      %1684 = vmatpush.msra.mxu0 0.0
      %1685 = vmatpush.msra.mxu0 0.0
      %1686 = vmatpush.msra.mxu0 0.0
      %1687 = vmatpush.msra.mxu0 0.0
      %1688 = vmatpush.msra.mxu0 0.0
      %1689 = vmatpush.msra.mxu0 0.0
      %1690 = vmatpush.msra.mxu0 0.0
      %1691 = vmatpush.msra.mxu0 %v1567
      %1692 = vmatmul.f32.gmra.mxu0 %v1671
      %v1693 = vpop.f32.mrf.mxu0
      %v1694 = vadd.f32 %v1575, %v1693
      %1695 = vmatmul.f32.gmra.mxu0 %v1674
      %v1696 = vpop.f32.mrf.mxu0
      %v1697 = vadd.f32 %v1580, %v1696
      %1698 = vdwg.mxu0
      %v1700 = vsel %vm1582, %v1420, 0
      %v1703 = vsel %vm1582, %v1421, 0
      %1705 = vmatpush.msra.mxu0 0.0
      %1706 = vmatpush.msra.mxu0 0.0
      %1707 = vmatpush.msra.mxu0 0.0
      %1708 = vmatpush.msra.mxu0 0.0
      %1709 = vmatpush.msra.mxu0 0.0
      %1710 = vmatpush.msra.mxu0 0.0
      %1711 = vmatpush.msra.mxu0 0.0
      %1712 = vmatpush.msra.mxu0 0.0
      %1713 = vmatpush.msra.mxu0 0.0
      %1714 = vmatpush.msra.mxu0 0.0
      %1715 = vmatpush.msra.mxu0 0.0
      %1716 = vmatpush.msra.mxu0 0.0
      %1717 = vmatpush.msra.mxu0 0.0
      %1718 = vmatpush.msra.mxu0 0.0
      %1719 = vmatpush.msra.mxu0 0.0
      %1720 = vmatpush.msra.mxu0 %v1568
      %1721 = vmatmul.f32.gmra.mxu0 %v1700
      %v1722 = vpop.f32.mrf.mxu0
      %v1723 = vadd.f32 %v1575, %v1722
      %1724 = vmatmul.f32.gmra.mxu0 %v1703
      %v1725 = vpop.f32.mrf.mxu0
      %v1726 = vadd.f32 %v1580, %v1725
      %1727 = vdwg.mxu0
      %v1729 = vsel %vm1582, %v1452, 0
      %v1732 = vsel %vm1582, %v1453, 0
      %1734 = vmatpush.msra.mxu0 0.0
      %1735 = vmatpush.msra.mxu0 0.0
      %1736 = vmatpush.msra.mxu0 0.0
      %1737 = vmatpush.msra.mxu0 0.0
      %1738 = vmatpush.msra.mxu0 0.0
      %1739 = vmatpush.msra.mxu0 0.0
      %1740 = vmatpush.msra.mxu0 0.0
      %1741 = vmatpush.msra.mxu0 0.0
      %1742 = vmatpush.msra.mxu0 0.0
      %1743 = vmatpush.msra.mxu0 0.0
      %1744 = vmatpush.msra.mxu0 0.0
      %1745 = vmatpush.msra.mxu0 0.0
      %1746 = vmatpush.msra.mxu0 0.0
      %1747 = vmatpush.msra.mxu0 0.0
      %1748 = vmatpush.msra.mxu0 0.0
      %1749 = vmatpush.msra.mxu0 %v1569
      %1750 = vmatmul.f32.gmra.mxu0 %v1729
      %v1751 = vpop.f32.mrf.mxu0
      %v1752 = vadd.f32 %v1575, %v1751
      %1753 = vmatmul.f32.gmra.mxu0 %v1732
      %v1754 = vpop.f32.mrf.mxu0
      %v1755 = vadd.f32 %v1580, %v1754
      %1756 = vdwg.mxu0
      %v1758 = vsel %vm1582, %v1484, 0
      %v1761 = vsel %vm1582, %v1485, 0
      %1763 = vmatpush.msra.mxu0 0.0
      %1764 = vmatpush.msra.mxu0 0.0
      %1765 = vmatpush.msra.mxu0 0.0
      %1766 = vmatpush.msra.mxu0 0.0
      %1767 = vmatpush.msra.mxu0 0.0
      %1768 = vmatpush.msra.mxu0 0.0
      %1769 = vmatpush.msra.mxu0 0.0
      %1770 = vmatpush.msra.mxu0 0.0
      %1771 = vmatpush.msra.mxu0 0.0
      %1772 = vmatpush.msra.mxu0 0.0
      %1773 = vmatpush.msra.mxu0 0.0
      %1774 = vmatpush.msra.mxu0 0.0
      %1775 = vmatpush.msra.mxu0 0.0
      %1776 = vmatpush.msra.mxu0 0.0
      %1777 = vmatpush.msra.mxu0 0.0
      %1778 = vmatpush.msra.mxu0 %v1570
      %1779 = vmatmul.f32.gmra.mxu0 %v1758
      %v1780 = vpop.f32.mrf.mxu0
      %v1781 = vadd.f32 %v1575, %v1780
      %1782 = vmatmul.f32.gmra.mxu0 %v1761
      %v1783 = vpop.f32.mrf.mxu0
      %v1784 = vadd.f32 %v1580, %v1783
      %1785 = vdwg.mxu0
      %v1787 = vsel %vm1582, %v1516, 0
      %v1790 = vsel %vm1582, %v1517, 0
      %1792 = vmatpush.msra.mxu0 0.0
      %1793 = vmatpush.msra.mxu0 0.0
      %1794 = vmatpush.msra.mxu0 0.0
      %1795 = vmatpush.msra.mxu0 0.0
      %1796 = vmatpush.msra.mxu0 0.0
      %1797 = vmatpush.msra.mxu0 0.0
      %1798 = vmatpush.msra.mxu0 0.0
      %1799 = vmatpush.msra.mxu0 0.0
      %1800 = vmatpush.msra.mxu0 0.0
      %1801 = vmatpush.msra.mxu0 0.0
      %1802 = vmatpush.msra.mxu0 0.0
      %1803 = vmatpush.msra.mxu0 0.0
      %1804 = vmatpush.msra.mxu0 0.0
      %1805 = vmatpush.msra.mxu0 0.0
      %1806 = vmatpush.msra.mxu0 0.0
      %1807 = vmatpush.msra.mxu0 %v1571
      %1808 = vmatmul.f32.gmra.mxu0 %v1787
      %v1809 = vpop.f32.mrf.mxu0
      %v1810 = vadd.f32 %v1575, %v1809
      %1811 = vmatmul.f32.gmra.mxu0 %v1790
      %v1812 = vpop.f32.mrf.mxu0
      %v1813 = vadd.f32 %v1580, %v1812
      %1814 = vdwg.mxu0
      %vm1815 = vcmask 195584
      %1816 = vst.msk [vmem:[%s334] sm:$0xff] %vm1815, %v1607
      %vm1817 = vcmask 191488
      %1818 = vst.msk [vmem:[%s334 + $0x8] sm:$0xf] %vm1817, %v1610
      %1819 = vst.msk [vmem:[%s334 + $0x10] sm:$0xff] %vm1815, %v1636
      %1820 = vst.msk [vmem:[%s334 + $0x18] sm:$0xf] %vm1817, %v1639
      %1821 = vst.msk [vmem:[%s334 + $0x20] sm:$0xff] %vm1815, %v1665
      %1822 = vst.msk [vmem:[%s334 + $0x28] sm:$0xf] %vm1817, %v1668
      %1823 = vst.msk [vmem:[%s334 + $0x30] sm:$0xff] %vm1815, %v1694
      %1824 = vst.msk [vmem:[%s334 + $0x38] sm:$0xf] %vm1817, %v1697
      %1825 = vst.msk [vmem:[%s334 + $0x40] sm:$0xff] %vm1815, %v1723
      %1826 = vst.msk [vmem:[%s334 + $0x48] sm:$0xf] %vm1817, %v1726
      %1827 = vst.msk [vmem:[%s334 + $0x50] sm:$0xff] %vm1815, %v1752
      %1828 = vst.msk [vmem:[%s334 + $0x58] sm:$0xf] %vm1817, %v1755
      %1829 = vst.msk [vmem:[%s334 + $0x60] sm:$0xff] %vm1815, %v1781
      %1830 = vst.msk [vmem:[%s334 + $0x68] sm:$0xf] %vm1817, %v1784
      %1831 = vst.msk [vmem:[%s334 + $0x70] sm:$0xff] %vm1815, %v1810
      %1832 = vst.msk [vmem:[%s334 + $0x78] sm:$0xf] %vm1817, %v1813
      %s1833 = smul.u32 8, %s19
      %p1834 = scmp.lt.s32.totalorder %s1833, 15
      %s1835 = scalar_select %p1834, %s1833, 15
      %s1836 = smul.addr %s1835, 2
      %s1837 = smul.addr %s1836, 8
      %s1838 = scalar_lea.vmem %s8, %s1837
      // Predicated region
      $region53: #{tpu_custom_call.1} parent=51 // pred_check
        %p1839 = pneg %p215
      $region54: #{tpu_custom_call.1} parent=51 // pred_check_branch
        %1841 = sbr.rel (%p1839) target = $region56
      $region55: #{tpu_custom_call.1} parent=51 // pred_region
        %s1842 = smul.u32 8, %s19
      $region56: #{tpu_custom_call.1} parent=51 // pred_fallthru
        _
    $region52: #{tpu_custom_call.1} parent=5 // pred_fallthru
      _
    %p1843 = scmp.le.s32.totalorder 2, %s14
    // Predicated region
    $region57: #{tpu_custom_call.1} parent=5 // pred_check
      %p1844 = pneg %p1843
    $region58: #{tpu_custom_call.1} parent=5 // pred_check_branch
      %1846 = sbr.rel (%p1844) target = $region60
    $region59: #{tpu_custom_call.1} parent=5 // pred_region
      %s1847 = ssub.s32 %s14, 2
      // Predicated region
      $region61: #{tpu_custom_call.1} parent=59 // pred_check
        %p1848 = pneg %p221
      $region62: #{tpu_custom_call.1} parent=59 // pred_check_branch
        %1850 = sbr.rel (%p1848) target = $region64
      $region63: #{tpu_custom_call.1} parent=59 // pred_region
        %s1851 = smul.u32 8, %s20
        %p1852 = scmp.lt.s32.totalorder %s1851, 15
        %s1853 = scalar_select %p1852, %s1851, 15
        %s1854 = smul.addr %s1853, 2
        %s1855 = smul.addr %s1854, 8
        %s1856 = scalar_lea.vmem %s8, %s1855
      $region64: #{tpu_custom_call.1} parent=59 // pred_fallthru
        _
    $region60: #{tpu_custom_call.1} parent=5 // pred_fallthru
      _
  $region6: #{tpu_custom_call.1} parent=0 // loop_footer
    %s18 = sadd.s32 1, %s14
  $region7: #{tpu_custom_call.1} parent=0 // loop_footer_branch
    %13 = sbr.rel target = $region3
  $region8: #{tpu_custom_call.1} parent=0 // loop_exit
    _

</llo_original>
